<compile_context>
chip_gen: v6e
topology: v6e:2x2x1
jax: 0.10.0
libtpu: 0.0.40
codegen_flags: <defaults>
</compile_context>

<pallas_src>
import numpy as np
import jax
import jax.numpy as jnp
from jax.experimental import pallas as pl
from jax.experimental.pallas import tpu as pltpu


# ----------------------------- "flags" (hyperparameters) -----------------------------
class Flags:
    freq_low = 0.5
    freq_high = 5.0
    num_spec_points = 128          # lane-friendly
    num_lorentz_osc = 8
    linear = [8, 32, 32]           # [input_dim, hidden, layer_size]
    normalize_input = True
    geoboundary = [-1.0, 0.5, -1.0, -1.0, 1.0, 3.0, 1.0, 1.0]


FLAGS = Flags()

LEAKY_SLOPE = 0.01
BN_EPS = 1e-5
_C_LIGHT = 3.0e8
_THETA_COEF = float(0.0033 * np.pi)
_KD_COEF = float(2.0 * np.pi * 1e12 / _C_LIGHT * 1e-6)   # (2*pi*f*1e12/c) * (d_um*1e-6)
if FLAGS.normalize_input:
    _D_SCALE = 0.5 * (FLAGS.geoboundary[5] - FLAGS.geoboundary[1])
    _D_SHIFT = 0.5 * (FLAGS.geoboundary[5] + FLAGS.geoboundary[1])
else:
    _D_SCALE, _D_SHIFT = 1.0, 0.0

_O = FLAGS.num_lorentz_osc
_HEAD_W = 64                       # fused-head width: 6*O + 2 = 50, lane-padded to 64
assert 6 * _O + 2 <= _HEAD_W
_S = FLAGS.num_spec_points
_FREQ_LOW = float(FLAGS.freq_low)
_FREQ_STEP = float((FLAGS.freq_high - FLAGS.freq_low) / FLAGS.num_spec_points)

_PI = float(np.pi)
_PI_2 = float(np.pi / 2)
_PI_4 = float(np.pi / 4)
_TAN_PI_8 = 0.4142135623730950
_TAN_3PI_8 = 2.414213562373095


# ----------------------------- in-kernel math helpers -----------------------------
def _leaky(x):
    return jnp.where(x > 0, x, LEAKY_SLOPE * x)


def _recip(x):
    # EUP approx reciprocal + one Newton step (~f32 accurate); keeps divides off VALU.
    r = pl.reciprocal(x, approx=True)
    return r * (2.0 - x * r)


def _cmul(ar, ai, br, bi):
    return ar * br - ai * bi, ar * bi + ai * br


def _cdiv(ar, ai, br, bi):
    inv = _recip(br * br + bi * bi)          # one shared reciprocal per complex divide
    return (ar * br + ai * bi) * inv, (ai * br - ar * bi) * inv


def _cinv(br, bi):
    inv = _recip(br * br + bi * bi)
    return br * inv, -bi * inv


def _csqrt(ar, ai):
    # principal branch; for ai == +0 and ar < 0 returns +i*sqrt(|ar|), matching torch
    mag = jnp.sqrt(ar * ar + ai * ai)
    re = jnp.sqrt(jnp.maximum(0.5 * (mag + ar), 0.0))
    im = jnp.sqrt(jnp.maximum(0.5 * (mag - ar), 0.0))
    return re, jnp.where(ai < 0.0, -im, im)


def _atan_pos(x):
    # cephes atanf-style range reduction + odd polynomial; x >= 0.
    # num/den selected FIRST so only one reciprocal is needed.
    # TODO(synk): no native TPU arctan; polynomial is ~1e-7 abs error vs torch.
    big = x > _TAN_3PI_8
    mid = jnp.logical_and(x > _TAN_PI_8, jnp.logical_not(big))
    y0 = jnp.where(big, _PI_2, jnp.where(mid, _PI_4, 0.0))
    num = jnp.where(big, -1.0, jnp.where(mid, x - 1.0, x))
    den = jnp.where(big, x, jnp.where(mid, x + 1.0, 1.0))
    xr = num * _recip(den)
    z = xr * xr
    p = (((8.05374449538e-2 * z - 1.38776856032e-1) * z + 1.99777106478e-1) * z
         - 3.33329491539e-1) * z * xr + xr
    return y0 + p


def _atan(x):
    a = _atan_pos(jnp.abs(x))
    return jnp.where(x >= 0.0, a, -a)


def _atan2(y, x):
    safe_x = jnp.where(x == 0.0, 1.0, x)
    base = _atan(y * _recip(safe_x))
    return jnp.where(
        x > 0.0, base,
        jnp.where(
            x < 0.0,
            jnp.where(y >= 0.0, base + _PI, base - _PI),
            jnp.where(y > 0.0, _PI_2, jnp.where(y < 0.0, -_PI_2, 0.0)),
        ),
    )


def _catan(ar, ai):
    # principal-branch complex arctan on (re, im) pairs; single log of a ratio
    re = 0.5 * _atan2(2.0 * ar, 1.0 - ar * ar - ai * ai)
    num = ar * ar + (ai + 1.0) ** 2
    den = ar * ar + (ai - 1.0) ** 2
    im = 0.25 * jnp.log(num * _recip(den))
    return re, im


def _ctan(ar, ai):
    # tan(a+bi): one exp pair shared between sinh/cosh, one shared reciprocal
    tar = 2.0 * ar
    ep = jnp.exp(2.0 * ai)
    em = jnp.exp(-2.0 * ai)
    inv = _recip(jnp.cos(tar) + 0.5 * (ep + em))
    return jnp.sin(tar) * inv, 0.5 * (ep - em) * inv


def _csincos(ar, ai):
    # sin(a+bi) and cos(a+bi) sharing one sin/cos/exp(+-x) set (4 transcendentals)
    s = jnp.sin(ar)
    c = jnp.cos(ar)
    ep = jnp.exp(ai)
    em = jnp.exp(-ai)
    ch = 0.5 * (ep + em)
    sh = 0.5 * (ep - em)
    return s * ch, c * sh, c * ch, -s * sh


# ----------------------------- fused kernel -----------------------------
def lorentz_fused_kernel(g_ref, w1t_ref, b1_ref, ga1_ref, be1_ref,
                         w2t_ref, b2_ref, ga2_ref, be2_ref, wh_ref, bh_ref,
                         out_ref, hp_ref, dd_ref):
    TB = out_ref.shape[0]
    S = out_ref.shape[1] // 4
    strip = 8 if TB % 8 == 0 else TB          # 8-row strips keep the chain in vregs
    n_strips = TB // strip

    # ---- tiny MLP trunk on the FULL batch (training-mode BatchNorm batch stats),
    #      recomputed per grid step (negligible cost), parked in VMEM scratch ----
    # TODO(synk): for very large B a separate trunk kernel amortizes this better.
    x = g_ref[...]
    for wt_ref, b_ref, ga_ref, be_ref in ((w1t_ref, b1_ref, ga1_ref, be1_ref),
                                          (w2t_ref, b2_ref, ga2_ref, be2_ref)):
        y = jnp.dot(x, wt_ref[...], preferred_element_type=jnp.float32) + b_ref[...]
        mean = jnp.mean(y, axis=0, keepdims=True)
        var = jnp.mean((y - mean) ** 2, axis=0, keepdims=True)   # biased, like torch BN
        x = _leaky((y - mean) * jax.lax.rsqrt(var + BN_EPS) * ga_ref[...] + be_ref[...])

    # torch applies F.leaky_relu(out) again inside every head; all 8 heads fused in
    # one lane-padded (32, 64) matmul.  |.| folded in here (torch abs()'s every head
    # value it uses, including eps_inf / mu_inf: `e1 += 1 + abs(eps_inf)`).
    heads = jnp.dot(_leaky(x), wh_ref[...], preferred_element_type=jnp.float32) + bh_ref[...]
    hp_ref[...] = jnp.abs(_leaky(heads))
    dd_ref[...] = g_ref[:, 1:2] * _D_SCALE + _D_SHIFT             # thickness (um)

    # ---- strip-loop invariants: frequency row built in-kernel ----
    col = jax.lax.broadcasted_iota(jnp.int32, (strip, S), 1).astype(jnp.float32)
    w_b = _FREQ_LOW + _FREQ_STEP * col        # (strip, S) frequency in THz
    w2_b = w_b * w_b

    tile_off = pl.program_id(0) * TB

    # ---- physics chain, 8 rows at a time (all temporaries are single vregs) ----
    @pl.loop(0, n_strips)
    def _strip(si):
        row = pl.multiple_of(si * strip, strip)
        arow = pl.multiple_of(tile_off + si * strip, strip)
        p = hp_ref[pl.ds(arow, strip), :]     # (strip, 64) |leaky(head)| params
        d = dd_ref[pl.ds(arow, strip), :]     # (strip, 1)  thickness in um

        e_w0 = p[:, 0 * _O:1 * _O]
        e_wp = p[:, 1 * _O:2 * _O]
        e_g = p[:, 2 * _O:3 * _O]
        m_w0 = p[:, 3 * _O:4 * _O]
        m_wp = p[:, 4 * _O:5 * _O]
        m_g = p[:, 5 * _O:6 * _O]
        e_inf = p[:, 6 * _O:6 * _O + 1]
        m_inf = p[:, 6 * _O + 1:6 * _O + 2]

        # squares precomputed on (strip, O) tiles
        e_w0sq = e_w0 * e_w0
        e_wp2 = e_wp * e_wp
        e_gsq = e_g * e_g
        m_w0sq = m_w0 * m_w0
        m_wp2 = m_wp * m_wp
        m_gsq = m_g * m_g

        # Lorentzian sums (torch: e1 = sum wp^2*(w0^2-w^2)/(denom+1e-5), then
        # e1 += 1 + |eps_inf| -> init folded into accumulator).  Imag parts accumulate
        # coef*g; the common factor w is applied ONCE after the loop.
        eps_re = jnp.broadcast_to(1.0 + e_inf, (strip, S))
        mu_re = jnp.broadcast_to(1.0 + m_inf, (strip, S))
        eim = jnp.zeros((strip, S), jnp.float32)
        mim = jnp.zeros((strip, S), jnp.float32)
        for o in range(_O):
            sl = slice(o, o + 1)
            # electric oscillator o (approx EUP recip, no Newton: +1e-5 dominates)
            d0 = e_w0sq[:, sl] - w2_b
            inv = pl.reciprocal(d0 * d0 + w2_b * e_gsq[:, sl] + 1e-5, approx=True)
            coef = e_wp2[:, sl] * inv
            eps_re = eps_re + coef * d0
            eim = eim + coef * e_g[:, sl]
            # magnetic oscillator o
            d0 = m_w0sq[:, sl] - w2_b
            inv = pl.reciprocal(d0 * d0 + w2_b * m_gsq[:, sl] + 1e-5, approx=True)
            coef = m_wp2[:, sl] * inv
            mu_re = mu_re + coef * d0
            mim = mim + coef * m_g[:, sl]
        eps_im = w_b * eim
        mu_im = w_b * mim

        # ---- theta / adv (effective-medium correction) ----
        theta_fac = (_THETA_COEF * d) * w_b
        pm_re, pm_im = _cmul(eps_re, eps_im, mu_re, mu_im)
        sq_re, sq_im = _csqrt(pm_re, pm_im)
        ht_re, ht_im = _catan(theta_fac * sq_re, theta_fac * sq_im)   # 0.5 * theta
        tt_re, tt_im = _ctan(ht_re, ht_im)
        adv_re, adv_im = _cdiv(ht_re, ht_im, tt_re, tt_im)

        ee_re, ee_im = _cmul(adv_re, adv_im, eps_re, eps_im)          # eps_eff
        me_re, me_im = _cmul(adv_re, adv_im, mu_re, mu_im)            # mu_eff

        n_re, n_im = _csqrt(*_cmul(ee_re, ee_im, me_re, me_im))
        n_im = jnp.abs(n_im)
        z_re, z_im = _csqrt(*_cdiv(me_re, me_im, ee_re, ee_im))
        z_re = jnp.abs(z_re)

        # ---- transfer matrix ----
        kd_fac = (_KD_COEF * d) * w_b                                 # k0 * d
        kd_re = kd_fac * n_re
        kd_im = kd_fac * n_im
        sin_re, sin_im, cos_re, cos_im = _csincos(kd_re, kd_im)

        iz_re, iz_im = _cinv(z_re + 1e-5, z_im)                       # 1/(z + 1e-5)

        # M12 = 0.5j * (z - 1/(z+1e-5)) * sin(kd)
        pr, pi_ = _cmul(z_re - iz_re, z_im - iz_im, sin_re, sin_im)
        m12_re = -0.5 * pi_
        m12_im = 0.5 * pr
        # M22 = cos(kd) - 0.5j*(z + 1/(z+1e-5))*sin(kd); r/t "+1e-5" folded in real part
        qr, qi = _cmul(z_re + iz_re, z_im + iz_im, sin_re, sin_im)
        m22_re = cos_re + 0.5 * qi + 1e-5
        m22_im = cos_im - 0.5 * qr

        # r = M12/(M22+1e-5), t = 1/(M22+1e-5): one shared denominator reciprocal,
        # packed into one lane-dense (strip, 4*S) write: [r_re | r_im | t_re | t_im]
        den_inv = _recip(m22_re * m22_re + m22_im * m22_im)
        out_ref[pl.ds(row, strip), pl.ds(0 * S, S)] = (m12_re * m22_re + m12_im * m22_im) * den_inv
        out_ref[pl.ds(row, strip), pl.ds(1 * S, S)] = (m12_im * m22_re - m12_re * m22_im) * den_inv
        out_ref[pl.ds(row, strip), pl.ds(2 * S, S)] = m22_re * den_inv
        out_ref[pl.ds(row, strip), pl.ds(3 * S, S)] = -m22_im * den_inv


# ----------------------------- wrapper -----------------------------
def _resident_spec(shape):
    nd = len(shape)
    return pl.BlockSpec(tuple(shape), lambda i, _nd=nd: (0,) * _nd)


def _choose_tb(B):
    """Rows per grid step: multiple of 8 dividing B, preferring >= 2 grid steps
    (v7x megacore) and capped at 512 rows to bound the per-step VMEM block."""
    if B < 16 or B % 8:
        return B
    cap = min(512, B // 2)
    for tb in range(cap - cap % 8, 7, -8):
        if B % tb == 0:
            return tb
    return B


def lorentz_dnn_forward(G, params):
    B = G.shape[0]
    S = _S
    O = _O

    # fuse all 8 head weight matrices into one lane-padded (L, 64) operand + bias row
    wh = jnp.concatenate(
        [params["ew0t"], params["ewpt"], params["egt"],
         params["mw0t"], params["mwpt"], params["mgt"],
         params["einf_w"].T, params["minf_w"].T], axis=1)
    wh = jnp.pad(wh, ((0, 0), (0, _HEAD_W - wh.shape[1])))
    bh = jnp.zeros((1, _HEAD_W), jnp.float32)
    bh = bh.at[0, 6 * O].set(params["einf_b"][0, 0])
    bh = bh.at[0, 6 * O + 1].set(params["minf_b"][0, 0])

    TB = _choose_tb(B)
    assert B % TB == 0

    inputs = [G,
              params["w1t"], params["b1"], params["gamma1"], params["beta1"],
              params["w2t"], params["b2"], params["gamma2"], params["beta2"],
              wh, bh]

    out = pl.pallas_call(
        lorentz_fused_kernel,
        grid=(B // TB,),
        in_specs=[_resident_spec(x.shape) for x in inputs],
        out_specs=pl.BlockSpec((TB, 4 * S), lambda i: (i, 0)),
        out_shape=jax.ShapeDtypeStruct((B, 4 * S), jnp.float32),
        scratch_shapes=[pltpu.VMEM((B, _HEAD_W), jnp.float32),   # |leaky(head)| params
                        pltpu.VMEM((B, 1), jnp.float32)],        # thickness (um)
        compiler_params=pltpu.CompilerParams(
            dimension_semantics=("parallel",),
            vmem_limit_bytes=32 * 1024 * 1024),
    )(*inputs)

    r = jax.lax.complex(out[:, 0 * S:1 * S], out[:, 1 * S:2 * S])   # complex64
    t = jax.lax.complex(out[:, 2 * S:3 * S], out[:, 3 * S:4 * S])
    return r, t


# ----------------------------- params / freq grid -----------------------------
def init_params(key, flags):
    dims = flags.linear
    assert len(dims) == 3, "kernel is written for the 2-layer MLP configured in FLAGS"
    keys = iter(jax.random.split(key, 32))

    def uni(k, shape, fan_in):
        bound = 1.0 / np.sqrt(fan_in)
        return jax.random.uniform(k, shape, jnp.float32, -bound, bound)

    p = {}
    p["w1t"] = uni(next(keys), (dims[0], dims[1]), dims[0])      # Linear weights, pre-transposed
    p["b1"] = uni(next(keys), (1, dims[1]), dims[0])
    p["gamma1"] = jnp.ones((1, dims[1]), jnp.float32)            # BN affine (PyTorch init)
    p["beta1"] = jnp.zeros((1, dims[1]), jnp.float32)
    p["w2t"] = uni(next(keys), (dims[1], dims[2]), dims[1])
    p["b2"] = uni(next(keys), (1, dims[2]), dims[1])
    p["gamma2"] = jnp.ones((1, dims[2]), jnp.float32)
    p["beta2"] = jnp.zeros((1, dims[2]), jnp.float32)

    L, O = dims[-1], flags.num_lorentz_osc
    for name in ("ew0t", "ewpt", "egt", "mw0t", "mwpt", "mgt"):
        p[name] = uni(next(keys), (L, O), L)                     # bias=False heads
    p["einf_w"] = uni(next(keys), (1, L), L)
    p["einf_b"] = uni(next(keys), (1, 1), L)
    p["minf_w"] = uni(next(keys), (1, L), L)
    p["minf_b"] = uni(next(keys), (1, 1), L)
    return p


def make_freq_grid(flags):
    step = (flags.freq_high - flags.freq_low) / flags.num_spec_points
    w_np = flags.freq_low + step * np.arange(flags.num_spec_points, dtype=np.float64)
    return jnp.asarray(w_np, dtype=jnp.float32)


# ----------------------------- pure-jnp reference (tolerance check only) -----------------------------
def lorentz_reference(G, params, w):
    """Non-Pallas mirror of the torch forward in float32/complex64."""
    lrelu = lambda v: jnp.where(v > 0, v, LEAKY_SLOPE * v)
    x = G
    for wt, b, ga, be in ((params["w1t"], params["b1"], params["gamma1"], params["beta1"]),
                          (params["w2t"], params["b2"], params["gamma2"], params["beta2"])):
        y = jnp.dot(x, wt) + b
        mean = jnp.mean(y, axis=0, keepdims=True)
        var = jnp.mean((y - mean) ** 2, axis=0, keepdims=True)
        x = lrelu((y - mean) / jnp.sqrt(var + BN_EPS) * ga + be)
    h = lrelu(x)
    head = lambda wt: lrelu(jnp.dot(h, wt))
    e_w0, e_wp, e_g = head(params["ew0t"]), head(params["ewpt"]), head(params["egt"])
    m_w0, m_wp, m_g = head(params["mw0t"]), head(params["mwpt"]), head(params["mgt"])
    e_inf = lrelu(jnp.dot(h, params["einf_w"].T) + params["einf_b"])
    m_inf = lrelu(jnp.dot(h, params["minf_w"].T) + params["minf_b"])

    wE = w.reshape(1, 1, -1)

    def lorentzian(w0, wp, g):
        w0 = jnp.abs(w0)[..., None]
        wp = jnp.abs(wp)[..., None]
        g = jnp.abs(g)[..., None]
        d0 = w0 ** 2 - wE ** 2
        denom = d0 ** 2 + wE ** 2 * g ** 2 + 1e-5
        return (jnp.sum(wp ** 2 * d0 / denom, axis=1),
                jnp.sum(wp ** 2 * wE * g / denom, axis=1))

    e1, e2 = lorentzian(e_w0, e_wp, e_g)
    mu1, mu2 = lorentzian(m_w0, m_wp, m_g)
    eps = ((e1 + 1.0 + jnp.abs(e_inf)) + 1j * e2).astype(jnp.complex64)
    mu = ((mu1 + 1.0 + jnp.abs(m_inf)) + 1j * mu2).astype(jnp.complex64)

    d = (G[:, 1] * _D_SCALE + _D_SHIFT)[:, None]
    w2 = w.reshape(1, -1)

    catan = lambda z: 0.5j * (jnp.log(1.0 - 1j * z) - jnp.log(1.0 + 1j * z))
    theta = 2.0 * catan(_THETA_COEF * w2 * d * jnp.sqrt(eps * mu))
    adv = (0.5 * theta) / (jnp.sin(0.5 * theta) / jnp.cos(0.5 * theta))
    eps_eff = adv * eps
    mu_eff = adv * mu
    n_eff = jnp.sqrt(eps_eff * mu_eff)
    n = n_eff.real + 1j * jnp.abs(n_eff.imag)
    z_eff = jnp.sqrt(mu_eff / eps_eff)
    z = jnp.abs(z_eff.real) + 1j * z_eff.imag

    kd = (_KD_COEF * w2 * d) * n
    sin_kd = jnp.sin(kd)
    cos_kd = jnp.cos(kd)
    M12 = 0.5j * (z - 1.0 / (z + 1e-5)) * sin_kd
    M22 = cos_kd - 0.5j * (z + 1.0 / (z + 1e-5)) * sin_kd
    r = M12 / (M22 + 1e-5)
    t = 1.0 / (M22 + 1e-5)
    return r.astype(jnp.complex64), t.astype(jnp.complex64)


if __name__ == "__main__":
    key = jax.random.PRNGKey(0)
    k_g, k_p = jax.random.split(key)

    B = 8
    # geometry in [-1, 1] (normalized), so de-normalized thickness d = G[:,1]*1.25 + 1.75 > 0
    G = jax.random.uniform(k_g, (B, FLAGS.linear[0]), jnp.float32, -1.0, 1.0)
    params = init_params(k_p, FLAGS)

    fwd = jax.jit(lorentz_dnn_forward)
    r, t = fwd(G, params)
    jax.block_until_ready((r, t))

    assert r.shape == (B, _S) and r.dtype == jnp.complex64
    assert t.shape == (B, _S) and t.dtype == jnp.complex64
    finite = (jnp.all(jnp.isfinite(r.real)) & jnp.all(jnp.isfinite(r.imag)) &
              jnp.all(jnp.isfinite(t.real)) & jnp.all(jnp.isfinite(t.imag)))
    assert bool(finite)

    # tolerance check vs. the pure-jnp mirror of the torch math (covers approx-recip,
    # polynomial arctan, f32 frequency grid, and dropping Newton in the osc loop)
    w_freq = make_freq_grid(FLAGS)
    r_ref, t_ref = jax.jit(lorentz_reference)(G, params, w_freq)
    jax.block_until_ready((r_ref, t_ref))
    err = max(float(jnp.max(jnp.abs(r - r_ref))), float(jnp.max(jnp.abs(t - t_ref))))
    assert err < 5e-2, f"kernel vs reference max |diff| = {err}"

    print("KERNEL_OK")
</pallas_src>

<mosaic_0001>
module attributes {stable_mosaic.version = 11 : i64} {
  func.func @lorentz_fused_kernel(%arg0: i32, %arg1: memref<8x8xf32, #tpu.memory_space<vmem>>, %arg2: memref<8x32xf32, #tpu.memory_space<vmem>>, %arg3: memref<1x32xf32, #tpu.memory_space<vmem>>, %arg4: memref<1x32xf32, #tpu.memory_space<vmem>>, %arg5: memref<1x32xf32, #tpu.memory_space<vmem>>, %arg6: memref<32x32xf32, #tpu.memory_space<vmem>>, %arg7: memref<1x32xf32, #tpu.memory_space<vmem>>, %arg8: memref<1x32xf32, #tpu.memory_space<vmem>>, %arg9: memref<1x32xf32, #tpu.memory_space<vmem>>, %arg10: memref<32x64xf32, #tpu.memory_space<vmem>>, %arg11: memref<1x64xf32, #tpu.memory_space<vmem>>, %arg12: memref<8x512xf32, #tpu.memory_space<vmem>>, %arg13: memref<8x64xf32, #tpu.memory_space<vmem>>, %arg14: memref<8x1xf32, #tpu.memory_space<vmem>>) attributes {dimension_semantics = [#tpu.dimension_semantics<parallel>], iteration_bounds = array<i64: 1>, scalar_prefetch = 0 : i64, scratch_operands = 2 : i64, tpu.core_type = #tpu.core_type<tc>, window_params = [{pipeline_mode = #tpu.pipeline_mode<synchronous>, transform_indices = @transform_0, window_bounds = array<i64: 8, 8>}, {pipeline_mode = #tpu.pipeline_mode<synchronous>, transform_indices = @transform_1, window_bounds = array<i64: 8, 32>}, {pipeline_mode = #tpu.pipeline_mode<synchronous>, transform_indices = @transform_2, window_bounds = array<i64: 1, 32>}, {pipeline_mode = #tpu.pipeline_mode<synchronous>, transform_indices = @transform_3, window_bounds = array<i64: 1, 32>}, {pipeline_mode = #tpu.pipeline_mode<synchronous>, transform_indices = @transform_4, window_bounds = array<i64: 1, 32>}, {pipeline_mode = #tpu.pipeline_mode<synchronous>, transform_indices = @transform_5, window_bounds = array<i64: 32, 32>}, {pipeline_mode = #tpu.pipeline_mode<synchronous>, transform_indices = @transform_6, window_bounds = array<i64: 1, 32>}, {pipeline_mode = #tpu.pipeline_mode<synchronous>, transform_indices = @transform_7, window_bounds = array<i64: 1, 32>}, {pipeline_mode = #tpu.pipeline_mode<synchronous>, transform_indices = @transform_8, window_bounds = array<i64: 1, 32>}, {pipeline_mode = #tpu.pipeline_mode<synchronous>, transform_indices = @transform_9, window_bounds = array<i64: 32, 64>}, {pipeline_mode = #tpu.pipeline_mode<synchronous>, transform_indices = @transform_10, window_bounds = array<i64: 1, 64>}, {transform_indices = @transform_11, window_bounds = array<i64: 8, 512>}]} {
    %c0 = arith.constant 0 : index
    %c0_0 = arith.constant 0 : index
    %0 = vector.load %arg1[%c0, %c0_0] : memref<8x8xf32, #tpu.memory_space<vmem>>, vector<8x8xf32>
    %c0_1 = arith.constant 0 : index
    %c0_2 = arith.constant 0 : index
    %1 = vector.load %arg2[%c0_1, %c0_2] : memref<8x32xf32, #tpu.memory_space<vmem>>, vector<8x32xf32>
    %cst = arith.constant dense<0.000000e+00> : vector<8x32xf32>
    %2 = tpu.matmul %0, %1, %cst {dimension_numbers = #tpu.dot_dimension_numbers<[1], [0], [0], [1], [0, 0, 1, 1], [], []>} : vector<8x8xf32>, vector<8x32xf32>, vector<8x32xf32> -> vector<8x32xf32>
    %c0_3 = arith.constant 0 : index
    %c0_4 = arith.constant 0 : index
    %3 = vector.load %arg3[%c0_3, %c0_4] : memref<1x32xf32, #tpu.memory_space<vmem>>, vector<1x32xf32>
    %4 = vector.broadcast %3 : vector<1x32xf32> to vector<8x32xf32>
    %5 = arith.addf %2, %4 : vector<8x32xf32>
    %cst_5 = arith.constant dense<0.000000e+00> : vector<32xf32>
    %6 = vector.multi_reduction <add>, %5, %cst_5 [0] : vector<8x32xf32> to vector<32xf32>
    %7 = vector.shape_cast %6 : vector<32xf32> to vector<1x32xf32>
    %cst_6 = arith.constant 8.000000e+00 : f32
    %8 = vector.broadcast %cst_6 : f32 to vector<1x32xf32>
    %9 = arith.divf %7, %8 : vector<1x32xf32>
    %10 = vector.broadcast %9 : vector<1x32xf32> to vector<8x32xf32>
    %11 = arith.subf %5, %10 : vector<8x32xf32>
    %12 = arith.mulf %11, %11 : vector<8x32xf32>
    %cst_7 = arith.constant dense<0.000000e+00> : vector<32xf32>
    %13 = vector.multi_reduction <add>, %12, %cst_7 [0] : vector<8x32xf32> to vector<32xf32>
    %14 = vector.shape_cast %13 : vector<32xf32> to vector<1x32xf32>
    %cst_8 = arith.constant 8.000000e+00 : f32
    %15 = vector.broadcast %cst_8 : f32 to vector<1x32xf32>
    %16 = arith.divf %14, %15 : vector<1x32xf32>
    %17 = vector.broadcast %9 : vector<1x32xf32> to vector<8x32xf32>
    %18 = arith.subf %5, %17 : vector<8x32xf32>
    %cst_9 = arith.constant 9.99999974E-6 : f32
    %19 = vector.broadcast %cst_9 : f32 to vector<1x32xf32>
    %20 = arith.addf %16, %19 : vector<1x32xf32>
    %21 = math.rsqrt %20 : vector<1x32xf32>
    %22 = vector.broadcast %21 : vector<1x32xf32> to vector<8x32xf32>
    %23 = arith.mulf %18, %22 : vector<8x32xf32>
    %c0_10 = arith.constant 0 : index
    %c0_11 = arith.constant 0 : index
    %24 = vector.load %arg4[%c0_10, %c0_11] : memref<1x32xf32, #tpu.memory_space<vmem>>, vector<1x32xf32>
    %25 = vector.broadcast %24 : vector<1x32xf32> to vector<8x32xf32>
    %26 = arith.mulf %23, %25 : vector<8x32xf32>
    %c0_12 = arith.constant 0 : index
    %c0_13 = arith.constant 0 : index
    %27 = vector.load %arg5[%c0_12, %c0_13] : memref<1x32xf32, #tpu.memory_space<vmem>>, vector<1x32xf32>
    %28 = vector.broadcast %27 : vector<1x32xf32> to vector<8x32xf32>
    %29 = arith.addf %26, %28 : vector<8x32xf32>
    %cst_14 = arith.constant 0.000000e+00 : f32
    %30 = vector.broadcast %cst_14 : f32 to vector<8x32xf32>
    %31 = arith.cmpf ogt, %29, %30 : vector<8x32xf32>
    %cst_15 = arith.constant 0.00999999977 : f32
    %32 = vector.broadcast %cst_15 : f32 to vector<8x32xf32>
    %33 = arith.mulf %32, %29 : vector<8x32xf32>
    %34 = arith.select %31, %29, %33 : vector<8x32xi1>, vector<8x32xf32>
    %c0_16 = arith.constant 0 : index
    %c0_17 = arith.constant 0 : index
    %35 = vector.load %arg6[%c0_16, %c0_17] : memref<32x32xf32, #tpu.memory_space<vmem>>, vector<32x32xf32>
    %cst_18 = arith.constant dense<0.000000e+00> : vector<8x32xf32>
    %36 = tpu.matmul %34, %35, %cst_18 {dimension_numbers = #tpu.dot_dimension_numbers<[1], [0], [0], [1], [0, 0, 1, 1], [], []>} : vector<8x32xf32>, vector<32x32xf32>, vector<8x32xf32> -> vector<8x32xf32>
    %c0_19 = arith.constant 0 : index
    %c0_20 = arith.constant 0 : index
    %37 = vector.load %arg7[%c0_19, %c0_20] : memref<1x32xf32, #tpu.memory_space<vmem>>, vector<1x32xf32>
    %38 = vector.broadcast %37 : vector<1x32xf32> to vector<8x32xf32>
    %39 = arith.addf %36, %38 : vector<8x32xf32>
    %cst_21 = arith.constant dense<0.000000e+00> : vector<32xf32>
    %40 = vector.multi_reduction <add>, %39, %cst_21 [0] : vector<8x32xf32> to vector<32xf32>
    %41 = vector.shape_cast %40 : vector<32xf32> to vector<1x32xf32>
    %cst_22 = arith.constant 8.000000e+00 : f32
    %42 = vector.broadcast %cst_22 : f32 to vector<1x32xf32>
    %43 = arith.divf %41, %42 : vector<1x32xf32>
    %44 = vector.broadcast %43 : vector<1x32xf32> to vector<8x32xf32>
    %45 = arith.subf %39, %44 : vector<8x32xf32>
    %46 = arith.mulf %45, %45 : vector<8x32xf32>
    %cst_23 = arith.constant dense<0.000000e+00> : vector<32xf32>
    %47 = vector.multi_reduction <add>, %46, %cst_23 [0] : vector<8x32xf32> to vector<32xf32>
    %48 = vector.shape_cast %47 : vector<32xf32> to vector<1x32xf32>
    %cst_24 = arith.constant 8.000000e+00 : f32
    %49 = vector.broadcast %cst_24 : f32 to vector<1x32xf32>
    %50 = arith.divf %48, %49 : vector<1x32xf32>
    %51 = vector.broadcast %43 : vector<1x32xf32> to vector<8x32xf32>
    %52 = arith.subf %39, %51 : vector<8x32xf32>
    %cst_25 = arith.constant 9.99999974E-6 : f32
    %53 = vector.broadcast %cst_25 : f32 to vector<1x32xf32>
    %54 = arith.addf %50, %53 : vector<1x32xf32>
    %55 = math.rsqrt %54 : vector<1x32xf32>
    %56 = vector.broadcast %55 : vector<1x32xf32> to vector<8x32xf32>
    %57 = arith.mulf %52, %56 : vector<8x32xf32>
    %c0_26 = arith.constant 0 : index
    %c0_27 = arith.constant 0 : index
    %58 = vector.load %arg8[%c0_26, %c0_27] : memref<1x32xf32, #tpu.memory_space<vmem>>, vector<1x32xf32>
    %59 = vector.broadcast %58 : vector<1x32xf32> to vector<8x32xf32>
    %60 = arith.mulf %57, %59 : vector<8x32xf32>
    %c0_28 = arith.constant 0 : index
    %c0_29 = arith.constant 0 : index
    %61 = vector.load %arg9[%c0_28, %c0_29] : memref<1x32xf32, #tpu.memory_space<vmem>>, vector<1x32xf32>
    %62 = vector.broadcast %61 : vector<1x32xf32> to vector<8x32xf32>
    %63 = arith.addf %60, %62 : vector<8x32xf32>
    %cst_30 = arith.constant 0.000000e+00 : f32
    %64 = vector.broadcast %cst_30 : f32 to vector<8x32xf32>
    %65 = arith.cmpf ogt, %63, %64 : vector<8x32xf32>
    %cst_31 = arith.constant 0.00999999977 : f32
    %66 = vector.broadcast %cst_31 : f32 to vector<8x32xf32>
    %67 = arith.mulf %66, %63 : vector<8x32xf32>
    %68 = arith.select %65, %63, %67 : vector<8x32xi1>, vector<8x32xf32>
    %cst_32 = arith.constant 0.000000e+00 : f32
    %69 = vector.broadcast %cst_32 : f32 to vector<8x32xf32>
    %70 = arith.cmpf ogt, %68, %69 : vector<8x32xf32>
    %cst_33 = arith.constant 0.00999999977 : f32
    %71 = vector.broadcast %cst_33 : f32 to vector<8x32xf32>
    %72 = arith.mulf %71, %68 : vector<8x32xf32>
    %73 = arith.select %70, %68, %72 : vector<8x32xi1>, vector<8x32xf32>
    %c0_34 = arith.constant 0 : index
    %c0_35 = arith.constant 0 : index
    %74 = vector.load %arg10[%c0_34, %c0_35] : memref<32x64xf32, #tpu.memory_space<vmem>>, vector<32x64xf32>
    %cst_36 = arith.constant dense<0.000000e+00> : vector<8x64xf32>
    %75 = tpu.matmul %73, %74, %cst_36 {dimension_numbers = #tpu.dot_dimension_numbers<[1], [0], [0], [1], [0, 0, 1, 1], [], []>} : vector<8x32xf32>, vector<32x64xf32>, vector<8x64xf32> -> vector<8x64xf32>
    %c0_37 = arith.constant 0 : index
    %c0_38 = arith.constant 0 : index
    %76 = vector.load %arg11[%c0_37, %c0_38] : memref<1x64xf32, #tpu.memory_space<vmem>>, vector<1x64xf32>
    %77 = vector.broadcast %76 : vector<1x64xf32> to vector<8x64xf32>
    %78 = arith.addf %75, %77 : vector<8x64xf32>
    %cst_39 = arith.constant 0.000000e+00 : f32
    %79 = vector.broadcast %cst_39 : f32 to vector<8x64xf32>
    %80 = arith.cmpf ogt, %78, %79 : vector<8x64xf32>
    %cst_40 = arith.constant 0.00999999977 : f32
    %81 = vector.broadcast %cst_40 : f32 to vector<8x64xf32>
    %82 = arith.mulf %81, %78 : vector<8x64xf32>
    %83 = arith.select %80, %78, %82 : vector<8x64xi1>, vector<8x64xf32>
    %84 = math.absf %83 : vector<8x64xf32>
    %c0_41 = arith.constant 0 : index
    %c0_42 = arith.constant 0 : index
    %85 = vector.load %arg13[%c0_41, %c0_42] : memref<8x64xf32, #tpu.memory_space<vmem>>, vector<8x64xf32>
    tpu.vector_store %arg13[%c0_41, %c0_42], %84 {strides = array<i32>} : memref<8x64xf32, #tpu.memory_space<vmem>>, vector<8x64xf32>,
    %c0_43 = arith.constant 0 : index
    %c1 = arith.constant 1 : index
    %86 = vector.load %arg1[%c0_43, %c1] : memref<8x8xf32, #tpu.memory_space<vmem>>, vector<8x1xf32>
    %cst_44 = arith.constant 1.250000e+00 : f32
    %87 = vector.broadcast %cst_44 : f32 to vector<8x1xf32>
    %88 = arith.mulf %86, %87 : vector<8x1xf32>
    %cst_45 = arith.constant 1.750000e+00 : f32
    %89 = vector.broadcast %cst_45 : f32 to vector<8x1xf32>
    %90 = arith.addf %88, %89 : vector<8x1xf32>
    %c0_46 = arith.constant 0 : index
    %c0_47 = arith.constant 0 : index
    %91 = vector.load %arg14[%c0_46, %c0_47] : memref<8x1xf32, #tpu.memory_space<vmem>>, vector<8x1xf32>
    tpu.vector_store %arg14[%c0_46, %c0_47], %90 {strides = array<i32>} : memref<8x1xf32, #tpu.memory_space<vmem>>, vector<8x1xf32>,
    %92 = tpu.iota {dimensions = array<i32: 1>} : vector<8x128xi32>
    %93 = arith.sitofp %92 : vector<8x128xi32> to vector<8x128xf32>
    %cst_48 = arith.constant 0.03515625 : f32
    %94 = vector.broadcast %cst_48 : f32 to vector<8x128xf32>
    %95 = arith.mulf %94, %93 : vector<8x128xf32>
    %cst_49 = arith.constant 5.000000e-01 : f32
    %96 = vector.broadcast %cst_49 : f32 to vector<8x128xf32>
    %97 = arith.addf %96, %95 : vector<8x128xf32>
    %98 = arith.mulf %97, %97 : vector<8x128xf32>
    %c8_i32 = arith.constant 8 : i32
    %99 = arith.muli %arg0, %c8_i32 : i32
    %c0_i32 = arith.constant 0 : i32
    %c1_i32 = arith.constant 1 : i32
    %100 = arith.muli %c0_i32, %c1_i32 : i32
    %c0_i32_50 = arith.constant 0 : i32
    %101 = arith.addi %c0_i32_50, %100 : i32
    %c8_i32_51 = arith.constant 8 : i32
    %102 = arith.muli %101, %c8_i32_51 : i32
    %103 = tpu.assume_multiple %102, 8 : i32
    %c8_i32_52 = arith.constant 8 : i32
    %104 = arith.muli %101, %c8_i32_52 : i32
    %105 = arith.addi %99, %104 : i32
    %106 = tpu.assume_multiple %105, 8 : i32
    %107 = arith.index_cast %106 : i32 to index
    %c0_53 = arith.constant 0 : index
    %108 = vector.load %arg13[%107, %c0_53] : memref<8x64xf32, #tpu.memory_space<vmem>>, vector<8x64xf32>
    %109 = arith.index_cast %106 : i32 to index
    %c0_54 = arith.constant 0 : index
    %110 = vector.load %arg14[%109, %c0_54] : memref<8x1xf32, #tpu.memory_space<vmem>>, vector<8x1xf32>
    %111 = vector.extract_strided_slice %108 {offsets = [0, 0], sizes = [8, 8], strides = [1, 1]} : vector<8x64xf32> to vector<8x8xf32>
    %112 = vector.extract_strided_slice %108 {offsets = [0, 8], sizes = [8, 8], strides = [1, 1]} : vector<8x64xf32> to vector<8x8xf32>
    %113 = vector.extract_strided_slice %108 {offsets = [0, 16], sizes = [8, 8], strides = [1, 1]} : vector<8x64xf32> to vector<8x8xf32>
    %114 = vector.extract_strided_slice %108 {offsets = [0, 24], sizes = [8, 8], strides = [1, 1]} : vector<8x64xf32> to vector<8x8xf32>
    %115 = vector.extract_strided_slice %108 {offsets = [0, 32], sizes = [8, 8], strides = [1, 1]} : vector<8x64xf32> to vector<8x8xf32>
    %116 = vector.extract_strided_slice %108 {offsets = [0, 40], sizes = [8, 8], strides = [1, 1]} : vector<8x64xf32> to vector<8x8xf32>
    %117 = vector.extract_strided_slice %108 {offsets = [0, 48], sizes = [8, 1], strides = [1, 1]} : vector<8x64xf32> to vector<8x1xf32>
    %118 = vector.extract_strided_slice %108 {offsets = [0, 49], sizes = [8, 1], strides = [1, 1]} : vector<8x64xf32> to vector<8x1xf32>
    %119 = arith.mulf %111, %111 : vector<8x8xf32>
    %120 = arith.mulf %112, %112 : vector<8x8xf32>
    %121 = arith.mulf %113, %113 : vector<8x8xf32>
    %122 = arith.mulf %114, %114 : vector<8x8xf32>
    %123 = arith.mulf %115, %115 : vector<8x8xf32>
    %124 = arith.mulf %116, %116 : vector<8x8xf32>
    %cst_55 = arith.constant 1.000000e+00 : f32
    %125 = vector.broadcast %cst_55 : f32 to vector<8x1xf32>
    %126 = arith.addf %125, %117 : vector<8x1xf32>
    %127 = vector.shape_cast %126 : vector<8x1xf32> to vector<8x1xf32>
    %128 = vector.broadcast %127 : vector<8x1xf32> to vector<8x128xf32>
    %cst_56 = arith.constant 1.000000e+00 : f32
    %129 = vector.broadcast %cst_56 : f32 to vector<8x1xf32>
    %130 = arith.addf %129, %118 : vector<8x1xf32>
    %131 = vector.shape_cast %130 : vector<8x1xf32> to vector<8x1xf32>
    %132 = vector.broadcast %131 : vector<8x1xf32> to vector<8x128xf32>
    %cst_57 = arith.constant 0.000000e+00 : f32
    %133 = vector.broadcast %cst_57 : f32 to vector<8x128xf32>
    %cst_58 = arith.constant 0.000000e+00 : f32
    %134 = vector.broadcast %cst_58 : f32 to vector<8x128xf32>
    %135 = vector.extract_strided_slice %119 {offsets = [0, 0], sizes = [8, 1], strides = [1, 1]} : vector<8x8xf32> to vector<8x1xf32>
    %136 = vector.broadcast %135 : vector<8x1xf32> to vector<8x128xf32>
    %137 = arith.subf %136, %98 : vector<8x128xf32>
    %138 = arith.mulf %137, %137 : vector<8x128xf32>
    %139 = vector.extract_strided_slice %121 {offsets = [0, 0], sizes = [8, 1], strides = [1, 1]} : vector<8x8xf32> to vector<8x1xf32>
    %140 = vector.broadcast %139 : vector<8x1xf32> to vector<8x128xf32>
    %141 = arith.mulf %98, %140 : vector<8x128xf32>
    %142 = arith.addf %138, %141 : vector<8x128xf32>
    %cst_59 = arith.constant 9.99999974E-6 : f32
    %143 = vector.broadcast %cst_59 : f32 to vector<8x128xf32>
    %144 = arith.addf %142, %143 : vector<8x128xf32>
    %145 = tpu.reciprocal %144 {approx = true} : vector<8x128xf32> -> vector<8x128xf32>
    %146 = vector.extract_strided_slice %120 {offsets = [0, 0], sizes = [8, 1], strides = [1, 1]} : vector<8x8xf32> to vector<8x1xf32>
    %147 = vector.broadcast %146 : vector<8x1xf32> to vector<8x128xf32>
    %148 = arith.mulf %147, %145 : vector<8x128xf32>
    %149 = arith.mulf %148, %137 : vector<8x128xf32>
    %150 = arith.addf %128, %149 : vector<8x128xf32>
    %151 = vector.extract_strided_slice %113 {offsets = [0, 0], sizes = [8, 1], strides = [1, 1]} : vector<8x8xf32> to vector<8x1xf32>
    %152 = vector.broadcast %151 : vector<8x1xf32> to vector<8x128xf32>
    %153 = arith.mulf %148, %152 : vector<8x128xf32>
    %154 = arith.addf %133, %153 : vector<8x128xf32>
    %155 = vector.extract_strided_slice %122 {offsets = [0, 0], sizes = [8, 1], strides = [1, 1]} : vector<8x8xf32> to vector<8x1xf32>
    %156 = vector.broadcast %155 : vector<8x1xf32> to vector<8x128xf32>
    %157 = arith.subf %156, %98 : vector<8x128xf32>
    %158 = arith.mulf %157, %157 : vector<8x128xf32>
    %159 = vector.extract_strided_slice %124 {offsets = [0, 0], sizes = [8, 1], strides = [1, 1]} : vector<8x8xf32> to vector<8x1xf32>
    %160 = vector.broadcast %159 : vector<8x1xf32> to vector<8x128xf32>
    %161 = arith.mulf %98, %160 : vector<8x128xf32>
    %162 = arith.addf %158, %161 : vector<8x128xf32>
    %cst_60 = arith.constant 9.99999974E-6 : f32
    %163 = vector.broadcast %cst_60 : f32 to vector<8x128xf32>
    %164 = arith.addf %162, %163 : vector<8x128xf32>
    %165 = tpu.reciprocal %164 {approx = true} : vector<8x128xf32> -> vector<8x128xf32>
    %166 = vector.extract_strided_slice %123 {offsets = [0, 0], sizes = [8, 1], strides = [1, 1]} : vector<8x8xf32> to vector<8x1xf32>
    %167 = vector.broadcast %166 : vector<8x1xf32> to vector<8x128xf32>
    %168 = arith.mulf %167, %165 : vector<8x128xf32>
    %169 = arith.mulf %168, %157 : vector<8x128xf32>
    %170 = arith.addf %132, %169 : vector<8x128xf32>
    %171 = vector.extract_strided_slice %116 {offsets = [0, 0], sizes = [8, 1], strides = [1, 1]} : vector<8x8xf32> to vector<8x1xf32>
    %172 = vector.broadcast %171 : vector<8x1xf32> to vector<8x128xf32>
    %173 = arith.mulf %168, %172 : vector<8x128xf32>
    %174 = arith.addf %134, %173 : vector<8x128xf32>
    %175 = vector.extract_strided_slice %119 {offsets = [0, 1], sizes = [8, 1], strides = [1, 1]} : vector<8x8xf32> to vector<8x1xf32>
    %176 = vector.broadcast %175 : vector<8x1xf32> to vector<8x128xf32>
    %177 = arith.subf %176, %98 : vector<8x128xf32>
    %178 = arith.mulf %177, %177 : vector<8x128xf32>
    %179 = vector.extract_strided_slice %121 {offsets = [0, 1], sizes = [8, 1], strides = [1, 1]} : vector<8x8xf32> to vector<8x1xf32>
    %180 = vector.broadcast %179 : vector<8x1xf32> to vector<8x128xf32>
    %181 = arith.mulf %98, %180 : vector<8x128xf32>
    %182 = arith.addf %178, %181 : vector<8x128xf32>
    %cst_61 = arith.constant 9.99999974E-6 : f32
    %183 = vector.broadcast %cst_61 : f32 to vector<8x128xf32>
    %184 = arith.addf %182, %183 : vector<8x128xf32>
    %185 = tpu.reciprocal %184 {approx = true} : vector<8x128xf32> -> vector<8x128xf32>
    %186 = vector.extract_strided_slice %120 {offsets = [0, 1], sizes = [8, 1], strides = [1, 1]} : vector<8x8xf32> to vector<8x1xf32>
    %187 = vector.broadcast %186 : vector<8x1xf32> to vector<8x128xf32>
    %188 = arith.mulf %187, %185 : vector<8x128xf32>
    %189 = arith.mulf %188, %177 : vector<8x128xf32>
    %190 = arith.addf %150, %189 : vector<8x128xf32>
    %191 = vector.extract_strided_slice %113 {offsets = [0, 1], sizes = [8, 1], strides = [1, 1]} : vector<8x8xf32> to vector<8x1xf32>
    %192 = vector.broadcast %191 : vector<8x1xf32> to vector<8x128xf32>
    %193 = arith.mulf %188, %192 : vector<8x128xf32>
    %194 = arith.addf %154, %193 : vector<8x128xf32>
    %195 = vector.extract_strided_slice %122 {offsets = [0, 1], sizes = [8, 1], strides = [1, 1]} : vector<8x8xf32> to vector<8x1xf32>
    %196 = vector.broadcast %195 : vector<8x1xf32> to vector<8x128xf32>
    %197 = arith.subf %196, %98 : vector<8x128xf32>
    %198 = arith.mulf %197, %197 : vector<8x128xf32>
    %199 = vector.extract_strided_slice %124 {offsets = [0, 1], sizes = [8, 1], strides = [1, 1]} : vector<8x8xf32> to vector<8x1xf32>
    %200 = vector.broadcast %199 : vector<8x1xf32> to vector<8x128xf32>
    %201 = arith.mulf %98, %200 : vector<8x128xf32>
    %202 = arith.addf %198, %201 : vector<8x128xf32>
    %cst_62 = arith.constant 9.99999974E-6 : f32
    %203 = vector.broadcast %cst_62 : f32 to vector<8x128xf32>
    %204 = arith.addf %202, %203 : vector<8x128xf32>
    %205 = tpu.reciprocal %204 {approx = true} : vector<8x128xf32> -> vector<8x128xf32>
    %206 = vector.extract_strided_slice %123 {offsets = [0, 1], sizes = [8, 1], strides = [1, 1]} : vector<8x8xf32> to vector<8x1xf32>
    %207 = vector.broadcast %206 : vector<8x1xf32> to vector<8x128xf32>
    %208 = arith.mulf %207, %205 : vector<8x128xf32>
    %209 = arith.mulf %208, %197 : vector<8x128xf32>
    %210 = arith.addf %170, %209 : vector<8x128xf32>
    %211 = vector.extract_strided_slice %116 {offsets = [0, 1], sizes = [8, 1], strides = [1, 1]} : vector<8x8xf32> to vector<8x1xf32>
    %212 = vector.broadcast %211 : vector<8x1xf32> to vector<8x128xf32>
    %213 = arith.mulf %208, %212 : vector<8x128xf32>
    %214 = arith.addf %174, %213 : vector<8x128xf32>
    %215 = vector.extract_strided_slice %119 {offsets = [0, 2], sizes = [8, 1], strides = [1, 1]} : vector<8x8xf32> to vector<8x1xf32>
    %216 = vector.broadcast %215 : vector<8x1xf32> to vector<8x128xf32>
    %217 = arith.subf %216, %98 : vector<8x128xf32>
    %218 = arith.mulf %217, %217 : vector<8x128xf32>
    %219 = vector.extract_strided_slice %121 {offsets = [0, 2], sizes = [8, 1], strides = [1, 1]} : vector<8x8xf32> to vector<8x1xf32>
    %220 = vector.broadcast %219 : vector<8x1xf32> to vector<8x128xf32>
    %221 = arith.mulf %98, %220 : vector<8x128xf32>
    %222 = arith.addf %218, %221 : vector<8x128xf32>
    %cst_63 = arith.constant 9.99999974E-6 : f32
    %223 = vector.broadcast %cst_63 : f32 to vector<8x128xf32>
    %224 = arith.addf %222, %223 : vector<8x128xf32>
    %225 = tpu.reciprocal %224 {approx = true} : vector<8x128xf32> -> vector<8x128xf32>
    %226 = vector.extract_strided_slice %120 {offsets = [0, 2], sizes = [8, 1], strides = [1, 1]} : vector<8x8xf32> to vector<8x1xf32>
    %227 = vector.broadcast %226 : vector<8x1xf32> to vector<8x128xf32>
    %228 = arith.mulf %227, %225 : vector<8x128xf32>
    %229 = arith.mulf %228, %217 : vector<8x128xf32>
    %230 = arith.addf %190, %229 : vector<8x128xf32>
    %231 = vector.extract_strided_slice %113 {offsets = [0, 2], sizes = [8, 1], strides = [1, 1]} : vector<8x8xf32> to vector<8x1xf32>
    %232 = vector.broadcast %231 : vector<8x1xf32> to vector<8x128xf32>
    %233 = arith.mulf %228, %232 : vector<8x128xf32>
    %234 = arith.addf %194, %233 : vector<8x128xf32>
    %235 = vector.extract_strided_slice %122 {offsets = [0, 2], sizes = [8, 1], strides = [1, 1]} : vector<8x8xf32> to vector<8x1xf32>
    %236 = vector.broadcast %235 : vector<8x1xf32> to vector<8x128xf32>
    %237 = arith.subf %236, %98 : vector<8x128xf32>
    %238 = arith.mulf %237, %237 : vector<8x128xf32>
    %239 = vector.extract_strided_slice %124 {offsets = [0, 2], sizes = [8, 1], strides = [1, 1]} : vector<8x8xf32> to vector<8x1xf32>
    %240 = vector.broadcast %239 : vector<8x1xf32> to vector<8x128xf32>
    %241 = arith.mulf %98, %240 : vector<8x128xf32>
    %242 = arith.addf %238, %241 : vector<8x128xf32>
    %cst_64 = arith.constant 9.99999974E-6 : f32
    %243 = vector.broadcast %cst_64 : f32 to vector<8x128xf32>
    %244 = arith.addf %242, %243 : vector<8x128xf32>
    %245 = tpu.reciprocal %244 {approx = true} : vector<8x128xf32> -> vector<8x128xf32>
    %246 = vector.extract_strided_slice %123 {offsets = [0, 2], sizes = [8, 1], strides = [1, 1]} : vector<8x8xf32> to vector<8x1xf32>
    %247 = vector.broadcast %246 : vector<8x1xf32> to vector<8x128xf32>
    %248 = arith.mulf %247, %245 : vector<8x128xf32>
    %249 = arith.mulf %248, %237 : vector<8x128xf32>
    %250 = arith.addf %210, %249 : vector<8x128xf32>
    %251 = vector.extract_strided_slice %116 {offsets = [0, 2], sizes = [8, 1], strides = [1, 1]} : vector<8x8xf32> to vector<8x1xf32>
    %252 = vector.broadcast %251 : vector<8x1xf32> to vector<8x128xf32>
    %253 = arith.mulf %248, %252 : vector<8x128xf32>
    %254 = arith.addf %214, %253 : vector<8x128xf32>
    %255 = vector.extract_strided_slice %119 {offsets = [0, 3], sizes = [8, 1], strides = [1, 1]} : vector<8x8xf32> to vector<8x1xf32>
    %256 = vector.broadcast %255 : vector<8x1xf32> to vector<8x128xf32>
    %257 = arith.subf %256, %98 : vector<8x128xf32>
    %258 = arith.mulf %257, %257 : vector<8x128xf32>
    %259 = vector.extract_strided_slice %121 {offsets = [0, 3], sizes = [8, 1], strides = [1, 1]} : vector<8x8xf32> to vector<8x1xf32>
    %260 = vector.broadcast %259 : vector<8x1xf32> to vector<8x128xf32>
    %261 = arith.mulf %98, %260 : vector<8x128xf32>
    %262 = arith.addf %258, %261 : vector<8x128xf32>
    %cst_65 = arith.constant 9.99999974E-6 : f32
    %263 = vector.broadcast %cst_65 : f32 to vector<8x128xf32>
    %264 = arith.addf %262, %263 : vector<8x128xf32>
    %265 = tpu.reciprocal %264 {approx = true} : vector<8x128xf32> -> vector<8x128xf32>
    %266 = vector.extract_strided_slice %120 {offsets = [0, 3], sizes = [8, 1], strides = [1, 1]} : vector<8x8xf32> to vector<8x1xf32>
    %267 = vector.broadcast %266 : vector<8x1xf32> to vector<8x128xf32>
    %268 = arith.mulf %267, %265 : vector<8x128xf32>
    %269 = arith.mulf %268, %257 : vector<8x128xf32>
    %270 = arith.addf %230, %269 : vector<8x128xf32>
    %271 = vector.extract_strided_slice %113 {offsets = [0, 3], sizes = [8, 1], strides = [1, 1]} : vector<8x8xf32> to vector<8x1xf32>
    %272 = vector.broadcast %271 : vector<8x1xf32> to vector<8x128xf32>
    %273 = arith.mulf %268, %272 : vector<8x128xf32>
    %274 = arith.addf %234, %273 : vector<8x128xf32>
    %275 = vector.extract_strided_slice %122 {offsets = [0, 3], sizes = [8, 1], strides = [1, 1]} : vector<8x8xf32> to vector<8x1xf32>
    %276 = vector.broadcast %275 : vector<8x1xf32> to vector<8x128xf32>
    %277 = arith.subf %276, %98 : vector<8x128xf32>
    %278 = arith.mulf %277, %277 : vector<8x128xf32>
    %279 = vector.extract_strided_slice %124 {offsets = [0, 3], sizes = [8, 1], strides = [1, 1]} : vector<8x8xf32> to vector<8x1xf32>
    %280 = vector.broadcast %279 : vector<8x1xf32> to vector<8x128xf32>
    %281 = arith.mulf %98, %280 : vector<8x128xf32>
    %282 = arith.addf %278, %281 : vector<8x128xf32>
    %cst_66 = arith.constant 9.99999974E-6 : f32
    %283 = vector.broadcast %cst_66 : f32 to vector<8x128xf32>
    %284 = arith.addf %282, %283 : vector<8x128xf32>
    %285 = tpu.reciprocal %284 {approx = true} : vector<8x128xf32> -> vector<8x128xf32>
    %286 = vector.extract_strided_slice %123 {offsets = [0, 3], sizes = [8, 1], strides = [1, 1]} : vector<8x8xf32> to vector<8x1xf32>
    %287 = vector.broadcast %286 : vector<8x1xf32> to vector<8x128xf32>
    %288 = arith.mulf %287, %285 : vector<8x128xf32>
    %289 = arith.mulf %288, %277 : vector<8x128xf32>
    %290 = arith.addf %250, %289 : vector<8x128xf32>
    %291 = vector.extract_strided_slice %116 {offsets = [0, 3], sizes = [8, 1], strides = [1, 1]} : vector<8x8xf32> to vector<8x1xf32>
    %292 = vector.broadcast %291 : vector<8x1xf32> to vector<8x128xf32>
    %293 = arith.mulf %288, %292 : vector<8x128xf32>
    %294 = arith.addf %254, %293 : vector<8x128xf32>
    %295 = vector.extract_strided_slice %119 {offsets = [0, 4], sizes = [8, 1], strides = [1, 1]} : vector<8x8xf32> to vector<8x1xf32>
    %296 = vector.broadcast %295 : vector<8x1xf32> to vector<8x128xf32>
    %297 = arith.subf %296, %98 : vector<8x128xf32>
    %298 = arith.mulf %297, %297 : vector<8x128xf32>
    %299 = vector.extract_strided_slice %121 {offsets = [0, 4], sizes = [8, 1], strides = [1, 1]} : vector<8x8xf32> to vector<8x1xf32>
    %300 = vector.broadcast %299 : vector<8x1xf32> to vector<8x128xf32>
    %301 = arith.mulf %98, %300 : vector<8x128xf32>
    %302 = arith.addf %298, %301 : vector<8x128xf32>
    %cst_67 = arith.constant 9.99999974E-6 : f32
    %303 = vector.broadcast %cst_67 : f32 to vector<8x128xf32>
    %304 = arith.addf %302, %303 : vector<8x128xf32>
    %305 = tpu.reciprocal %304 {approx = true} : vector<8x128xf32> -> vector<8x128xf32>
    %306 = vector.extract_strided_slice %120 {offsets = [0, 4], sizes = [8, 1], strides = [1, 1]} : vector<8x8xf32> to vector<8x1xf32>
    %307 = vector.broadcast %306 : vector<8x1xf32> to vector<8x128xf32>
    %308 = arith.mulf %307, %305 : vector<8x128xf32>
    %309 = arith.mulf %308, %297 : vector<8x128xf32>
    %310 = arith.addf %270, %309 : vector<8x128xf32>
    %311 = vector.extract_strided_slice %113 {offsets = [0, 4], sizes = [8, 1], strides = [1, 1]} : vector<8x8xf32> to vector<8x1xf32>
    %312 = vector.broadcast %311 : vector<8x1xf32> to vector<8x128xf32>
    %313 = arith.mulf %308, %312 : vector<8x128xf32>
    %314 = arith.addf %274, %313 : vector<8x128xf32>
    %315 = vector.extract_strided_slice %122 {offsets = [0, 4], sizes = [8, 1], strides = [1, 1]} : vector<8x8xf32> to vector<8x1xf32>
    %316 = vector.broadcast %315 : vector<8x1xf32> to vector<8x128xf32>
    %317 = arith.subf %316, %98 : vector<8x128xf32>
    %318 = arith.mulf %317, %317 : vector<8x128xf32>
    %319 = vector.extract_strided_slice %124 {offsets = [0, 4], sizes = [8, 1], strides = [1, 1]} : vector<8x8xf32> to vector<8x1xf32>
    %320 = vector.broadcast %319 : vector<8x1xf32> to vector<8x128xf32>
    %321 = arith.mulf %98, %320 : vector<8x128xf32>
    %322 = arith.addf %318, %321 : vector<8x128xf32>
    %cst_68 = arith.constant 9.99999974E-6 : f32
    %323 = vector.broadcast %cst_68 : f32 to vector<8x128xf32>
    %324 = arith.addf %322, %323 : vector<8x128xf32>
    %325 = tpu.reciprocal %324 {approx = true} : vector<8x128xf32> -> vector<8x128xf32>
    %326 = vector.extract_strided_slice %123 {offsets = [0, 4], sizes = [8, 1], strides = [1, 1]} : vector<8x8xf32> to vector<8x1xf32>
    %327 = vector.broadcast %326 : vector<8x1xf32> to vector<8x128xf32>
    %328 = arith.mulf %327, %325 : vector<8x128xf32>
    %329 = arith.mulf %328, %317 : vector<8x128xf32>
    %330 = arith.addf %290, %329 : vector<8x128xf32>
    %331 = vector.extract_strided_slice %116 {offsets = [0, 4], sizes = [8, 1], strides = [1, 1]} : vector<8x8xf32> to vector<8x1xf32>
    %332 = vector.broadcast %331 : vector<8x1xf32> to vector<8x128xf32>
    %333 = arith.mulf %328, %332 : vector<8x128xf32>
    %334 = arith.addf %294, %333 : vector<8x128xf32>
    %335 = vector.extract_strided_slice %119 {offsets = [0, 5], sizes = [8, 1], strides = [1, 1]} : vector<8x8xf32> to vector<8x1xf32>
    %336 = vector.broadcast %335 : vector<8x1xf32> to vector<8x128xf32>
    %337 = arith.subf %336, %98 : vector<8x128xf32>
    %338 = arith.mulf %337, %337 : vector<8x128xf32>
    %339 = vector.extract_strided_slice %121 {offsets = [0, 5], sizes = [8, 1], strides = [1, 1]} : vector<8x8xf32> to vector<8x1xf32>
    %340 = vector.broadcast %339 : vector<8x1xf32> to vector<8x128xf32>
    %341 = arith.mulf %98, %340 : vector<8x128xf32>
    %342 = arith.addf %338, %341 : vector<8x128xf32>
    %cst_69 = arith.constant 9.99999974E-6 : f32
    %343 = vector.broadcast %cst_69 : f32 to vector<8x128xf32>
    %344 = arith.addf %342, %343 : vector<8x128xf32>
    %345 = tpu.reciprocal %344 {approx = true} : vector<8x128xf32> -> vector<8x128xf32>
    %346 = vector.extract_strided_slice %120 {offsets = [0, 5], sizes = [8, 1], strides = [1, 1]} : vector<8x8xf32> to vector<8x1xf32>
    %347 = vector.broadcast %346 : vector<8x1xf32> to vector<8x128xf32>
    %348 = arith.mulf %347, %345 : vector<8x128xf32>
    %349 = arith.mulf %348, %337 : vector<8x128xf32>
    %350 = arith.addf %310, %349 : vector<8x128xf32>
    %351 = vector.extract_strided_slice %113 {offsets = [0, 5], sizes = [8, 1], strides = [1, 1]} : vector<8x8xf32> to vector<8x1xf32>
    %352 = vector.broadcast %351 : vector<8x1xf32> to vector<8x128xf32>
    %353 = arith.mulf %348, %352 : vector<8x128xf32>
    %354 = arith.addf %314, %353 : vector<8x128xf32>
    %355 = vector.extract_strided_slice %122 {offsets = [0, 5], sizes = [8, 1], strides = [1, 1]} : vector<8x8xf32> to vector<8x1xf32>
    %356 = vector.broadcast %355 : vector<8x1xf32> to vector<8x128xf32>
    %357 = arith.subf %356, %98 : vector<8x128xf32>
    %358 = arith.mulf %357, %357 : vector<8x128xf32>
    %359 = vector.extract_strided_slice %124 {offsets = [0, 5], sizes = [8, 1], strides = [1, 1]} : vector<8x8xf32> to vector<8x1xf32>
    %360 = vector.broadcast %359 : vector<8x1xf32> to vector<8x128xf32>
    %361 = arith.mulf %98, %360 : vector<8x128xf32>
    %362 = arith.addf %358, %361 : vector<8x128xf32>
    %cst_70 = arith.constant 9.99999974E-6 : f32
    %363 = vector.broadcast %cst_70 : f32 to vector<8x128xf32>
    %364 = arith.addf %362, %363 : vector<8x128xf32>
    %365 = tpu.reciprocal %364 {approx = true} : vector<8x128xf32> -> vector<8x128xf32>
    %366 = vector.extract_strided_slice %123 {offsets = [0, 5], sizes = [8, 1], strides = [1, 1]} : vector<8x8xf32> to vector<8x1xf32>
    %367 = vector.broadcast %366 : vector<8x1xf32> to vector<8x128xf32>
    %368 = arith.mulf %367, %365 : vector<8x128xf32>
    %369 = arith.mulf %368, %357 : vector<8x128xf32>
    %370 = arith.addf %330, %369 : vector<8x128xf32>
    %371 = vector.extract_strided_slice %116 {offsets = [0, 5], sizes = [8, 1], strides = [1, 1]} : vector<8x8xf32> to vector<8x1xf32>
    %372 = vector.broadcast %371 : vector<8x1xf32> to vector<8x128xf32>
    %373 = arith.mulf %368, %372 : vector<8x128xf32>
    %374 = arith.addf %334, %373 : vector<8x128xf32>
    %375 = vector.extract_strided_slice %119 {offsets = [0, 6], sizes = [8, 1], strides = [1, 1]} : vector<8x8xf32> to vector<8x1xf32>
    %376 = vector.broadcast %375 : vector<8x1xf32> to vector<8x128xf32>
    %377 = arith.subf %376, %98 : vector<8x128xf32>
    %378 = arith.mulf %377, %377 : vector<8x128xf32>
    %379 = vector.extract_strided_slice %121 {offsets = [0, 6], sizes = [8, 1], strides = [1, 1]} : vector<8x8xf32> to vector<8x1xf32>
    %380 = vector.broadcast %379 : vector<8x1xf32> to vector<8x128xf32>
    %381 = arith.mulf %98, %380 : vector<8x128xf32>
    %382 = arith.addf %378, %381 : vector<8x128xf32>
    %cst_71 = arith.constant 9.99999974E-6 : f32
    %383 = vector.broadcast %cst_71 : f32 to vector<8x128xf32>
    %384 = arith.addf %382, %383 : vector<8x128xf32>
    %385 = tpu.reciprocal %384 {approx = true} : vector<8x128xf32> -> vector<8x128xf32>
    %386 = vector.extract_strided_slice %120 {offsets = [0, 6], sizes = [8, 1], strides = [1, 1]} : vector<8x8xf32> to vector<8x1xf32>
    %387 = vector.broadcast %386 : vector<8x1xf32> to vector<8x128xf32>
    %388 = arith.mulf %387, %385 : vector<8x128xf32>
    %389 = arith.mulf %388, %377 : vector<8x128xf32>
    %390 = arith.addf %350, %389 : vector<8x128xf32>
    %391 = vector.extract_strided_slice %113 {offsets = [0, 6], sizes = [8, 1], strides = [1, 1]} : vector<8x8xf32> to vector<8x1xf32>
    %392 = vector.broadcast %391 : vector<8x1xf32> to vector<8x128xf32>
    %393 = arith.mulf %388, %392 : vector<8x128xf32>
    %394 = arith.addf %354, %393 : vector<8x128xf32>
    %395 = vector.extract_strided_slice %122 {offsets = [0, 6], sizes = [8, 1], strides = [1, 1]} : vector<8x8xf32> to vector<8x1xf32>
    %396 = vector.broadcast %395 : vector<8x1xf32> to vector<8x128xf32>
    %397 = arith.subf %396, %98 : vector<8x128xf32>
    %398 = arith.mulf %397, %397 : vector<8x128xf32>
    %399 = vector.extract_strided_slice %124 {offsets = [0, 6], sizes = [8, 1], strides = [1, 1]} : vector<8x8xf32> to vector<8x1xf32>
    %400 = vector.broadcast %399 : vector<8x1xf32> to vector<8x128xf32>
    %401 = arith.mulf %98, %400 : vector<8x128xf32>
    %402 = arith.addf %398, %401 : vector<8x128xf32>
    %cst_72 = arith.constant 9.99999974E-6 : f32
    %403 = vector.broadcast %cst_72 : f32 to vector<8x128xf32>
    %404 = arith.addf %402, %403 : vector<8x128xf32>
    %405 = tpu.reciprocal %404 {approx = true} : vector<8x128xf32> -> vector<8x128xf32>
    %406 = vector.extract_strided_slice %123 {offsets = [0, 6], sizes = [8, 1], strides = [1, 1]} : vector<8x8xf32> to vector<8x1xf32>
    %407 = vector.broadcast %406 : vector<8x1xf32> to vector<8x128xf32>
    %408 = arith.mulf %407, %405 : vector<8x128xf32>
    %409 = arith.mulf %408, %397 : vector<8x128xf32>
    %410 = arith.addf %370, %409 : vector<8x128xf32>
    %411 = vector.extract_strided_slice %116 {offsets = [0, 6], sizes = [8, 1], strides = [1, 1]} : vector<8x8xf32> to vector<8x1xf32>
    %412 = vector.broadcast %411 : vector<8x1xf32> to vector<8x128xf32>
    %413 = arith.mulf %408, %412 : vector<8x128xf32>
    %414 = arith.addf %374, %413 : vector<8x128xf32>
    %415 = vector.extract_strided_slice %119 {offsets = [0, 7], sizes = [8, 1], strides = [1, 1]} : vector<8x8xf32> to vector<8x1xf32>
    %416 = vector.broadcast %415 : vector<8x1xf32> to vector<8x128xf32>
    %417 = arith.subf %416, %98 : vector<8x128xf32>
    %418 = arith.mulf %417, %417 : vector<8x128xf32>
    %419 = vector.extract_strided_slice %121 {offsets = [0, 7], sizes = [8, 1], strides = [1, 1]} : vector<8x8xf32> to vector<8x1xf32>
    %420 = vector.broadcast %419 : vector<8x1xf32> to vector<8x128xf32>
    %421 = arith.mulf %98, %420 : vector<8x128xf32>
    %422 = arith.addf %418, %421 : vector<8x128xf32>
    %cst_73 = arith.constant 9.99999974E-6 : f32
    %423 = vector.broadcast %cst_73 : f32 to vector<8x128xf32>
    %424 = arith.addf %422, %423 : vector<8x128xf32>
    %425 = tpu.reciprocal %424 {approx = true} : vector<8x128xf32> -> vector<8x128xf32>
    %426 = vector.extract_strided_slice %120 {offsets = [0, 7], sizes = [8, 1], strides = [1, 1]} : vector<8x8xf32> to vector<8x1xf32>
    %427 = vector.broadcast %426 : vector<8x1xf32> to vector<8x128xf32>
    %428 = arith.mulf %427, %425 : vector<8x128xf32>
    %429 = arith.mulf %428, %417 : vector<8x128xf32>
    %430 = arith.addf %390, %429 : vector<8x128xf32>
    %431 = vector.extract_strided_slice %113 {offsets = [0, 7], sizes = [8, 1], strides = [1, 1]} : vector<8x8xf32> to vector<8x1xf32>
    %432 = vector.broadcast %431 : vector<8x1xf32> to vector<8x128xf32>
    %433 = arith.mulf %428, %432 : vector<8x128xf32>
    %434 = arith.addf %394, %433 : vector<8x128xf32>
    %435 = vector.extract_strided_slice %122 {offsets = [0, 7], sizes = [8, 1], strides = [1, 1]} : vector<8x8xf32> to vector<8x1xf32>
    %436 = vector.broadcast %435 : vector<8x1xf32> to vector<8x128xf32>
    %437 = arith.subf %436, %98 : vector<8x128xf32>
    %438 = arith.mulf %437, %437 : vector<8x128xf32>
    %439 = vector.extract_strided_slice %124 {offsets = [0, 7], sizes = [8, 1], strides = [1, 1]} : vector<8x8xf32> to vector<8x1xf32>
    %440 = vector.broadcast %439 : vector<8x1xf32> to vector<8x128xf32>
    %441 = arith.mulf %98, %440 : vector<8x128xf32>
    %442 = arith.addf %438, %441 : vector<8x128xf32>
    %cst_74 = arith.constant 9.99999974E-6 : f32
    %443 = vector.broadcast %cst_74 : f32 to vector<8x128xf32>
    %444 = arith.addf %442, %443 : vector<8x128xf32>
    %445 = tpu.reciprocal %444 {approx = true} : vector<8x128xf32> -> vector<8x128xf32>
    %446 = vector.extract_strided_slice %123 {offsets = [0, 7], sizes = [8, 1], strides = [1, 1]} : vector<8x8xf32> to vector<8x1xf32>
    %447 = vector.broadcast %446 : vector<8x1xf32> to vector<8x128xf32>
    %448 = arith.mulf %447, %445 : vector<8x128xf32>
    %449 = arith.mulf %448, %437 : vector<8x128xf32>
    %450 = arith.addf %410, %449 : vector<8x128xf32>
    %451 = vector.extract_strided_slice %116 {offsets = [0, 7], sizes = [8, 1], strides = [1, 1]} : vector<8x8xf32> to vector<8x1xf32>
    %452 = vector.broadcast %451 : vector<8x1xf32> to vector<8x128xf32>
    %453 = arith.mulf %448, %452 : vector<8x128xf32>
    %454 = arith.addf %414, %453 : vector<8x128xf32>
    %455 = arith.mulf %97, %434 : vector<8x128xf32>
    %456 = arith.mulf %97, %454 : vector<8x128xf32>
    %cst_75 = arith.constant 0.0103672557 : f32
    %457 = vector.broadcast %cst_75 : f32 to vector<8x1xf32>
    %458 = arith.mulf %457, %110 : vector<8x1xf32>
    %459 = vector.broadcast %458 : vector<8x1xf32> to vector<8x128xf32>
    %460 = arith.mulf %459, %97 : vector<8x128xf32>
    %461 = arith.mulf %430, %450 : vector<8x128xf32>
    %462 = arith.mulf %455, %456 : vector<8x128xf32>
    %463 = arith.subf %461, %462 : vector<8x128xf32>
    %464 = arith.mulf %430, %456 : vector<8x128xf32>
    %465 = arith.mulf %455, %450 : vector<8x128xf32>
    %466 = arith.addf %464, %465 : vector<8x128xf32>
    %467 = arith.mulf %463, %463 : vector<8x128xf32>
    %468 = arith.mulf %466, %466 : vector<8x128xf32>
    %469 = arith.addf %467, %468 : vector<8x128xf32>
    %470 = math.sqrt %469 : vector<8x128xf32>
    %471 = arith.addf %470, %463 : vector<8x128xf32>
    %cst_76 = arith.constant 5.000000e-01 : f32
    %472 = vector.broadcast %cst_76 : f32 to vector<8x128xf32>
    %473 = arith.mulf %472, %471 : vector<8x128xf32>
    %cst_77 = arith.constant 0.000000e+00 : f32
    %474 = vector.broadcast %cst_77 : f32 to vector<8x128xf32>
    %475 = arith.maximumf %473, %474 : vector<8x128xf32>
    %476 = math.sqrt %475 : vector<8x128xf32>
    %477 = arith.subf %470, %463 : vector<8x128xf32>
    %cst_78 = arith.constant 5.000000e-01 : f32
    %478 = vector.broadcast %cst_78 : f32 to vector<8x128xf32>
    %479 = arith.mulf %478, %477 : vector<8x128xf32>
    %cst_79 = arith.constant 0.000000e+00 : f32
    %480 = vector.broadcast %cst_79 : f32 to vector<8x128xf32>
    %481 = arith.maximumf %479, %480 : vector<8x128xf32>
    %482 = math.sqrt %481 : vector<8x128xf32>
    %cst_80 = arith.constant 0.000000e+00 : f32
    %483 = vector.broadcast %cst_80 : f32 to vector<8x128xf32>
    %484 = arith.cmpf olt, %466, %483 : vector<8x128xf32>
    %cst_81 = arith.constant 0.000000e+00 : f32
    %485 = vector.broadcast %cst_81 : f32 to vector<8x128xf32>
    %486 = arith.subf %485, %482 : vector<8x128xf32>
    %487 = arith.select %484, %486, %482 : vector<8x128xi1>, vector<8x128xf32>
    %488 = arith.mulf %460, %476 : vector<8x128xf32>
    %489 = arith.mulf %460, %487 : vector<8x128xf32>
    %cst_82 = arith.constant 2.000000e+00 : f32
    %490 = vector.broadcast %cst_82 : f32 to vector<8x128xf32>
    %491 = arith.mulf %490, %488 : vector<8x128xf32>
    %492 = arith.mulf %488, %488 : vector<8x128xf32>
    %cst_83 = arith.constant 1.000000e+00 : f32
    %493 = vector.broadcast %cst_83 : f32 to vector<8x128xf32>
    %494 = arith.subf %493, %492 : vector<8x128xf32>
    %495 = arith.mulf %489, %489 : vector<8x128xf32>
    %496 = arith.subf %494, %495 : vector<8x128xf32>
    %cst_84 = arith.constant 0.000000e+00 : f32
    %497 = vector.broadcast %cst_84 : f32 to vector<8x128xf32>
    %498 = arith.cmpf oeq, %496, %497 : vector<8x128xf32>
    %cst_85 = arith.constant 1.000000e+00 : f32
    %499 = vector.broadcast %cst_85 : f32 to vector<8x128xf32>
    %500 = arith.select %498, %499, %496 : vector<8x128xi1>, vector<8x128xf32>
    %501 = tpu.reciprocal %500 {approx = true} : vector<8x128xf32> -> vector<8x128xf32>
    %502 = arith.mulf %500, %501 : vector<8x128xf32>
    %cst_86 = arith.constant 2.000000e+00 : f32
    %503 = vector.broadcast %cst_86 : f32 to vector<8x128xf32>
    %504 = arith.subf %503, %502 : vector<8x128xf32>
    %505 = arith.mulf %501, %504 : vector<8x128xf32>
    %506 = arith.mulf %491, %505 : vector<8x128xf32>
    %507 = math.absf %506 : vector<8x128xf32>
    %cst_87 = arith.constant 2.41421366 : f32
    %508 = vector.broadcast %cst_87 : f32 to vector<8x128xf32>
    %509 = arith.cmpf ogt, %507, %508 : vector<8x128xf32>
    %cst_88 = arith.constant 0.414213568 : f32
    %510 = vector.broadcast %cst_88 : f32 to vector<8x128xf32>
    %511 = arith.cmpf ogt, %507, %510 : vector<8x128xf32>
    %cst_89 = arith.constant dense<true> : vector<8x128xi1>
    %512 = arith.xori %509, %cst_89 : vector<8x128xi1>
    %513 = arith.andi %511, %512 : vector<8x128xi1>
    %cst_90 = arith.constant 0.785398185 : f32
    %cst_91 = arith.constant 0.000000e+00 : f32
    %514 = vector.broadcast %cst_90 : f32 to vector<8x128xf32>
    %515 = vector.broadcast %cst_91 : f32 to vector<8x128xf32>
    %516 = arith.select %513, %514, %515 : vector<8x128xi1>, vector<8x128xf32>
    %cst_92 = arith.constant 1.57079637 : f32
    %517 = vector.broadcast %cst_92 : f32 to vector<8x128xf32>
    %518 = arith.select %509, %517, %516 : vector<8x128xi1>, vector<8x128xf32>
    %cst_93 = arith.constant 1.000000e+00 : f32
    %519 = vector.broadcast %cst_93 : f32 to vector<8x128xf32>
    %520 = arith.subf %507, %519 : vector<8x128xf32>
    %521 = arith.select %513, %520, %507 : vector<8x128xi1>, vector<8x128xf32>
    %cst_94 = arith.constant -1.000000e+00 : f32
    %522 = vector.broadcast %cst_94 : f32 to vector<8x128xf32>
    %523 = arith.select %509, %522, %521 : vector<8x128xi1>, vector<8x128xf32>
    %cst_95 = arith.constant 1.000000e+00 : f32
    %524 = vector.broadcast %cst_95 : f32 to vector<8x128xf32>
    %525 = arith.addf %507, %524 : vector<8x128xf32>
    %cst_96 = arith.constant 1.000000e+00 : f32
    %526 = vector.broadcast %cst_96 : f32 to vector<8x128xf32>
    %527 = arith.select %513, %525, %526 : vector<8x128xi1>, vector<8x128xf32>
    %528 = arith.select %509, %507, %527 : vector<8x128xi1>, vector<8x128xf32>
    %529 = tpu.reciprocal %528 {approx = true} : vector<8x128xf32> -> vector<8x128xf32>
    %530 = arith.mulf %528, %529 : vector<8x128xf32>
    %cst_97 = arith.constant 2.000000e+00 : f32
    %531 = vector.broadcast %cst_97 : f32 to vector<8x128xf32>
    %532 = arith.subf %531, %530 : vector<8x128xf32>
    %533 = arith.mulf %529, %532 : vector<8x128xf32>
    %534 = arith.mulf %523, %533 : vector<8x128xf32>
    %535 = arith.mulf %534, %534 : vector<8x128xf32>
    %cst_98 = arith.constant 0.0805374458 : f32
    %536 = vector.broadcast %cst_98 : f32 to vector<8x128xf32>
    %537 = arith.mulf %536, %535 : vector<8x128xf32>
    %cst_99 = arith.constant 0.138776854 : f32
    %538 = vector.broadcast %cst_99 : f32 to vector<8x128xf32>
    %539 = arith.subf %537, %538 : vector<8x128xf32>
    %540 = arith.mulf %539, %535 : vector<8x128xf32>
    %cst_100 = arith.constant 0.199777111 : f32
    %541 = vector.broadcast %cst_100 : f32 to vector<8x128xf32>
    %542 = arith.addf %540, %541 : vector<8x128xf32>
    %543 = arith.mulf %542, %535 : vector<8x128xf32>
    %cst_101 = arith.constant 0.333329499 : f32
    %544 = vector.broadcast %cst_101 : f32 to vector<8x128xf32>
    %545 = arith.subf %543, %544 : vector<8x128xf32>
    %546 = arith.mulf %545, %535 : vector<8x128xf32>
    %547 = arith.mulf %546, %534 : vector<8x128xf32>
    %548 = arith.addf %547, %534 : vector<8x128xf32>
    %549 = arith.addf %518, %548 : vector<8x128xf32>
    %cst_102 = arith.constant 0.000000e+00 : f32
    %550 = vector.broadcast %cst_102 : f32 to vector<8x128xf32>
    %551 = arith.cmpf oge, %506, %550 : vector<8x128xf32>
    %cst_103 = arith.constant 0.000000e+00 : f32
    %552 = vector.broadcast %cst_103 : f32 to vector<8x128xf32>
    %553 = arith.subf %552, %549 : vector<8x128xf32>
    %554 = arith.select %551, %549, %553 : vector<8x128xi1>, vector<8x128xf32>
    %cst_104 = arith.constant 0.000000e+00 : f32
    %555 = vector.broadcast %cst_104 : f32 to vector<8x128xf32>
    %556 = arith.cmpf ogt, %496, %555 : vector<8x128xf32>
    %cst_105 = arith.constant 0.000000e+00 : f32
    %557 = vector.broadcast %cst_105 : f32 to vector<8x128xf32>
    %558 = arith.cmpf olt, %496, %557 : vector<8x128xf32>
    %cst_106 = arith.constant 0.000000e+00 : f32
    %559 = vector.broadcast %cst_106 : f32 to vector<8x128xf32>
    %560 = arith.cmpf oge, %491, %559 : vector<8x128xf32>
    %cst_107 = arith.constant 3.14159274 : f32
    %561 = vector.broadcast %cst_107 : f32 to vector<8x128xf32>
    %562 = arith.addf %554, %561 : vector<8x128xf32>
    %cst_108 = arith.constant 3.14159274 : f32
    %563 = vector.broadcast %cst_108 : f32 to vector<8x128xf32>
    %564 = arith.subf %554, %563 : vector<8x128xf32>
    %565 = arith.select %560, %562, %564 : vector<8x128xi1>, vector<8x128xf32>
    %cst_109 = arith.constant 0.000000e+00 : f32
    %566 = vector.broadcast %cst_109 : f32 to vector<8x128xf32>
    %567 = arith.cmpf ogt, %491, %566 : vector<8x128xf32>
    %cst_110 = arith.constant 0.000000e+00 : f32
    %568 = vector.broadcast %cst_110 : f32 to vector<8x128xf32>
    %569 = arith.cmpf olt, %491, %568 : vector<8x128xf32>
    %cst_111 = arith.constant -1.57079637 : f32
    %cst_112 = arith.constant 0.000000e+00 : f32
    %570 = vector.broadcast %cst_111 : f32 to vector<8x128xf32>
    %571 = vector.broadcast %cst_112 : f32 to vector<8x128xf32>
    %572 = arith.select %569, %570, %571 : vector<8x128xi1>, vector<8x128xf32>
    %cst_113 = arith.constant 1.57079637 : f32
    %573 = vector.broadcast %cst_113 : f32 to vector<8x128xf32>
    %574 = arith.select %567, %573, %572 : vector<8x128xi1>, vector<8x128xf32>
    %575 = arith.select %558, %565, %574 : vector<8x128xi1>, vector<8x128xf32>
    %576 = arith.select %556, %554, %575 : vector<8x128xi1>, vector<8x128xf32>
    %cst_114 = arith.constant 5.000000e-01 : f32
    %577 = vector.broadcast %cst_114 : f32 to vector<8x128xf32>
    %578 = arith.mulf %577, %576 : vector<8x128xf32>
    %579 = arith.mulf %488, %488 : vector<8x128xf32>
    %cst_115 = arith.constant 1.000000e+00 : f32
    %580 = vector.broadcast %cst_115 : f32 to vector<8x128xf32>
    %581 = arith.addf %489, %580 : vector<8x128xf32>
    %582 = arith.mulf %581, %581 : vector<8x128xf32>
    %583 = arith.addf %579, %582 : vector<8x128xf32>
    %584 = arith.mulf %488, %488 : vector<8x128xf32>
    %cst_116 = arith.constant 1.000000e+00 : f32
    %585 = vector.broadcast %cst_116 : f32 to vector<8x128xf32>
    %586 = arith.subf %489, %585 : vector<8x128xf32>
    %587 = arith.mulf %586, %586 : vector<8x128xf32>
    %588 = arith.addf %584, %587 : vector<8x128xf32>
    %589 = tpu.reciprocal %588 {approx = true} : vector<8x128xf32> -> vector<8x128xf32>
    %590 = arith.mulf %588, %589 : vector<8x128xf32>
    %cst_117 = arith.constant 2.000000e+00 : f32
    %591 = vector.broadcast %cst_117 : f32 to vector<8x128xf32>
    %592 = arith.subf %591, %590 : vector<8x128xf32>
    %593 = arith.mulf %589, %592 : vector<8x128xf32>
    %594 = arith.mulf %583, %593 : vector<8x128xf32>
    %595 = math.log %594 : vector<8x128xf32>
    %cst_118 = arith.constant 2.500000e-01 : f32
    %596 = vector.broadcast %cst_118 : f32 to vector<8x128xf32>
    %597 = arith.mulf %596, %595 : vector<8x128xf32>
    %cst_119 = arith.constant 2.000000e+00 : f32
    %598 = vector.broadcast %cst_119 : f32 to vector<8x128xf32>
    %599 = arith.mulf %598, %578 : vector<8x128xf32>
    %cst_120 = arith.constant 2.000000e+00 : f32
    %600 = vector.broadcast %cst_120 : f32 to vector<8x128xf32>
    %601 = arith.mulf %600, %597 : vector<8x128xf32>
    %602 = math.exp %601 : vector<8x128xf32>
    %cst_121 = arith.constant -2.000000e+00 : f32
    %603 = vector.broadcast %cst_121 : f32 to vector<8x128xf32>
    %604 = arith.mulf %603, %597 : vector<8x128xf32>
    %605 = math.exp %604 : vector<8x128xf32>
    %606 = math.cos %599 : vector<8x128xf32>
    %607 = arith.addf %602, %605 : vector<8x128xf32>
    %cst_122 = arith.constant 5.000000e-01 : f32
    %608 = vector.broadcast %cst_122 : f32 to vector<8x128xf32>
    %609 = arith.mulf %608, %607 : vector<8x128xf32>
    %610 = arith.addf %606, %609 : vector<8x128xf32>
    %611 = tpu.reciprocal %610 {approx = true} : vector<8x128xf32> -> vector<8x128xf32>
    %612 = arith.mulf %610, %611 : vector<8x128xf32>
    %cst_123 = arith.constant 2.000000e+00 : f32
    %613 = vector.broadcast %cst_123 : f32 to vector<8x128xf32>
    %614 = arith.subf %613, %612 : vector<8x128xf32>
    %615 = arith.mulf %611, %614 : vector<8x128xf32>
    %616 = math.sin %599 : vector<8x128xf32>
    %617 = arith.mulf %616, %615 : vector<8x128xf32>
    %618 = arith.subf %602, %605 : vector<8x128xf32>
    %cst_124 = arith.constant 5.000000e-01 : f32
    %619 = vector.broadcast %cst_124 : f32 to vector<8x128xf32>
    %620 = arith.mulf %619, %618 : vector<8x128xf32>
    %621 = arith.mulf %620, %615 : vector<8x128xf32>
    %622 = arith.mulf %617, %617 : vector<8x128xf32>
    %623 = arith.mulf %621, %621 : vector<8x128xf32>
    %624 = arith.addf %622, %623 : vector<8x128xf32>
    %625 = tpu.reciprocal %624 {approx = true} : vector<8x128xf32> -> vector<8x128xf32>
    %626 = arith.mulf %624, %625 : vector<8x128xf32>
    %cst_125 = arith.constant 2.000000e+00 : f32
    %627 = vector.broadcast %cst_125 : f32 to vector<8x128xf32>
    %628 = arith.subf %627, %626 : vector<8x128xf32>
    %629 = arith.mulf %625, %628 : vector<8x128xf32>
    %630 = arith.mulf %578, %617 : vector<8x128xf32>
    %631 = arith.mulf %597, %621 : vector<8x128xf32>
    %632 = arith.addf %630, %631 : vector<8x128xf32>
    %633 = arith.mulf %632, %629 : vector<8x128xf32>
    %634 = arith.mulf %597, %617 : vector<8x128xf32>
    %635 = arith.mulf %578, %621 : vector<8x128xf32>
    %636 = arith.subf %634, %635 : vector<8x128xf32>
    %637 = arith.mulf %636, %629 : vector<8x128xf32>
    %638 = arith.mulf %633, %430 : vector<8x128xf32>
    %639 = arith.mulf %637, %455 : vector<8x128xf32>
    %640 = arith.subf %638, %639 : vector<8x128xf32>
    %641 = arith.mulf %633, %455 : vector<8x128xf32>
    %642 = arith.mulf %637, %430 : vector<8x128xf32>
    %643 = arith.addf %641, %642 : vector<8x128xf32>
    %644 = arith.mulf %633, %450 : vector<8x128xf32>
    %645 = arith.mulf %637, %456 : vector<8x128xf32>
    %646 = arith.subf %644, %645 : vector<8x128xf32>
    %647 = arith.mulf %633, %456 : vector<8x128xf32>
    %648 = arith.mulf %637, %450 : vector<8x128xf32>
    %649 = arith.addf %647, %648 : vector<8x128xf32>
    %650 = arith.mulf %640, %646 : vector<8x128xf32>
    %651 = arith.mulf %643, %649 : vector<8x128xf32>
    %652 = arith.subf %650, %651 : vector<8x128xf32>
    %653 = arith.mulf %640, %649 : vector<8x128xf32>
    %654 = arith.mulf %643, %646 : vector<8x128xf32>
    %655 = arith.addf %653, %654 : vector<8x128xf32>
    %656 = arith.mulf %652, %652 : vector<8x128xf32>
    %657 = arith.mulf %655, %655 : vector<8x128xf32>
    %658 = arith.addf %656, %657 : vector<8x128xf32>
    %659 = math.sqrt %658 : vector<8x128xf32>
    %660 = arith.addf %659, %652 : vector<8x128xf32>
    %cst_126 = arith.constant 5.000000e-01 : f32
    %661 = vector.broadcast %cst_126 : f32 to vector<8x128xf32>
    %662 = arith.mulf %661, %660 : vector<8x128xf32>
    %cst_127 = arith.constant 0.000000e+00 : f32
    %663 = vector.broadcast %cst_127 : f32 to vector<8x128xf32>
    %664 = arith.maximumf %662, %663 : vector<8x128xf32>
    %665 = math.sqrt %664 : vector<8x128xf32>
    %666 = arith.subf %659, %652 : vector<8x128xf32>
    %cst_128 = arith.constant 5.000000e-01 : f32
    %667 = vector.broadcast %cst_128 : f32 to vector<8x128xf32>
    %668 = arith.mulf %667, %666 : vector<8x128xf32>
    %cst_129 = arith.constant 0.000000e+00 : f32
    %669 = vector.broadcast %cst_129 : f32 to vector<8x128xf32>
    %670 = arith.maximumf %668, %669 : vector<8x128xf32>
    %671 = math.sqrt %670 : vector<8x128xf32>
    %cst_130 = arith.constant 0.000000e+00 : f32
    %672 = vector.broadcast %cst_130 : f32 to vector<8x128xf32>
    %673 = arith.cmpf olt, %655, %672 : vector<8x128xf32>
    %cst_131 = arith.constant 0.000000e+00 : f32
    %674 = vector.broadcast %cst_131 : f32 to vector<8x128xf32>
    %675 = arith.subf %674, %671 : vector<8x128xf32>
    %676 = arith.select %673, %675, %671 : vector<8x128xi1>, vector<8x128xf32>
    %677 = math.absf %676 : vector<8x128xf32>
    %678 = arith.mulf %640, %640 : vector<8x128xf32>
    %679 = arith.mulf %643, %643 : vector<8x128xf32>
    %680 = arith.addf %678, %679 : vector<8x128xf32>
    %681 = tpu.reciprocal %680 {approx = true} : vector<8x128xf32> -> vector<8x128xf32>
    %682 = arith.mulf %680, %681 : vector<8x128xf32>
    %cst_132 = arith.constant 2.000000e+00 : f32
    %683 = vector.broadcast %cst_132 : f32 to vector<8x128xf32>
    %684 = arith.subf %683, %682 : vector<8x128xf32>
    %685 = arith.mulf %681, %684 : vector<8x128xf32>
    %686 = arith.mulf %646, %640 : vector<8x128xf32>
    %687 = arith.mulf %649, %643 : vector<8x128xf32>
    %688 = arith.addf %686, %687 : vector<8x128xf32>
    %689 = arith.mulf %688, %685 : vector<8x128xf32>
    %690 = arith.mulf %649, %640 : vector<8x128xf32>
    %691 = arith.mulf %646, %643 : vector<8x128xf32>
    %692 = arith.subf %690, %691 : vector<8x128xf32>
    %693 = arith.mulf %692, %685 : vector<8x128xf32>
    %694 = arith.mulf %689, %689 : vector<8x128xf32>
    %695 = arith.mulf %693, %693 : vector<8x128xf32>
    %696 = arith.addf %694, %695 : vector<8x128xf32>
    %697 = math.sqrt %696 : vector<8x128xf32>
    %698 = arith.addf %697, %689 : vector<8x128xf32>
    %cst_133 = arith.constant 5.000000e-01 : f32
    %699 = vector.broadcast %cst_133 : f32 to vector<8x128xf32>
    %700 = arith.mulf %699, %698 : vector<8x128xf32>
    %cst_134 = arith.constant 0.000000e+00 : f32
    %701 = vector.broadcast %cst_134 : f32 to vector<8x128xf32>
    %702 = arith.maximumf %700, %701 : vector<8x128xf32>
    %703 = math.sqrt %702 : vector<8x128xf32>
    %704 = arith.subf %697, %689 : vector<8x128xf32>
    %cst_135 = arith.constant 5.000000e-01 : f32
    %705 = vector.broadcast %cst_135 : f32 to vector<8x128xf32>
    %706 = arith.mulf %705, %704 : vector<8x128xf32>
    %cst_136 = arith.constant 0.000000e+00 : f32
    %707 = vector.broadcast %cst_136 : f32 to vector<8x128xf32>
    %708 = arith.maximumf %706, %707 : vector<8x128xf32>
    %709 = math.sqrt %708 : vector<8x128xf32>
    %cst_137 = arith.constant 0.000000e+00 : f32
    %710 = vector.broadcast %cst_137 : f32 to vector<8x128xf32>
    %711 = arith.cmpf olt, %693, %710 : vector<8x128xf32>
    %cst_138 = arith.constant 0.000000e+00 : f32
    %712 = vector.broadcast %cst_138 : f32 to vector<8x128xf32>
    %713 = arith.subf %712, %709 : vector<8x128xf32>
    %714 = arith.select %711, %713, %709 : vector<8x128xi1>, vector<8x128xf32>
    %715 = math.absf %703 : vector<8x128xf32>
    %cst_139 = arith.constant 0.0209439509 : f32
    %716 = vector.broadcast %cst_139 : f32 to vector<8x1xf32>
    %717 = arith.mulf %716, %110 : vector<8x1xf32>
    %718 = vector.broadcast %717 : vector<8x1xf32> to vector<8x128xf32>
    %719 = arith.mulf %718, %97 : vector<8x128xf32>
    %720 = arith.mulf %719, %665 : vector<8x128xf32>
    %721 = arith.mulf %719, %677 : vector<8x128xf32>
    %722 = math.sin %720 : vector<8x128xf32>
    %723 = math.cos %720 : vector<8x128xf32>
    %724 = math.exp %721 : vector<8x128xf32>
    %cst_140 = arith.constant 0.000000e+00 : f32
    %725 = vector.broadcast %cst_140 : f32 to vector<8x128xf32>
    %726 = arith.subf %725, %721 : vector<8x128xf32>
    %727 = math.exp %726 : vector<8x128xf32>
    %728 = arith.addf %724, %727 : vector<8x128xf32>
    %cst_141 = arith.constant 5.000000e-01 : f32
    %729 = vector.broadcast %cst_141 : f32 to vector<8x128xf32>
    %730 = arith.mulf %729, %728 : vector<8x128xf32>
    %731 = arith.subf %724, %727 : vector<8x128xf32>
    %cst_142 = arith.constant 5.000000e-01 : f32
    %732 = vector.broadcast %cst_142 : f32 to vector<8x128xf32>
    %733 = arith.mulf %732, %731 : vector<8x128xf32>
    %734 = arith.mulf %722, %730 : vector<8x128xf32>
    %735 = arith.mulf %723, %733 : vector<8x128xf32>
    %736 = arith.mulf %723, %730 : vector<8x128xf32>
    %cst_143 = arith.constant 0.000000e+00 : f32
    %737 = vector.broadcast %cst_143 : f32 to vector<8x128xf32>
    %738 = arith.subf %737, %722 : vector<8x128xf32>
    %739 = arith.mulf %738, %733 : vector<8x128xf32>
    %cst_144 = arith.constant 9.99999974E-6 : f32
    %740 = vector.broadcast %cst_144 : f32 to vector<8x128xf32>
    %741 = arith.addf %715, %740 : vector<8x128xf32>
    %742 = arith.mulf %741, %741 : vector<8x128xf32>
    %743 = arith.mulf %714, %714 : vector<8x128xf32>
    %744 = arith.addf %742, %743 : vector<8x128xf32>
    %745 = tpu.reciprocal %744 {approx = true} : vector<8x128xf32> -> vector<8x128xf32>
    %746 = arith.mulf %744, %745 : vector<8x128xf32>
    %cst_145 = arith.constant 2.000000e+00 : f32
    %747 = vector.broadcast %cst_145 : f32 to vector<8x128xf32>
    %748 = arith.subf %747, %746 : vector<8x128xf32>
    %749 = arith.mulf %745, %748 : vector<8x128xf32>
    %750 = arith.mulf %741, %749 : vector<8x128xf32>
    %cst_146 = arith.constant 0.000000e+00 : f32
    %751 = vector.broadcast %cst_146 : f32 to vector<8x128xf32>
    %752 = arith.subf %751, %714 : vector<8x128xf32>
    %753 = arith.mulf %752, %749 : vector<8x128xf32>
    %754 = arith.subf %715, %750 : vector<8x128xf32>
    %755 = arith.subf %714, %753 : vector<8x128xf32>
    %756 = arith.mulf %754, %734 : vector<8x128xf32>
    %757 = arith.mulf %755, %735 : vector<8x128xf32>
    %758 = arith.subf %756, %757 : vector<8x128xf32>
    %759 = arith.mulf %754, %735 : vector<8x128xf32>
    %760 = arith.mulf %755, %734 : vector<8x128xf32>
    %761 = arith.addf %759, %760 : vector<8x128xf32>
    %cst_147 = arith.constant -5.000000e-01 : f32
    %762 = vector.broadcast %cst_147 : f32 to vector<8x128xf32>
    %763 = arith.mulf %762, %761 : vector<8x128xf32>
    %cst_148 = arith.constant 5.000000e-01 : f32
    %764 = vector.broadcast %cst_148 : f32 to vector<8x128xf32>
    %765 = arith.mulf %764, %758 : vector<8x128xf32>
    %766 = arith.addf %715, %750 : vector<8x128xf32>
    %767 = arith.addf %714, %753 : vector<8x128xf32>
    %768 = arith.mulf %766, %734 : vector<8x128xf32>
    %769 = arith.mulf %767, %735 : vector<8x128xf32>
    %770 = arith.subf %768, %769 : vector<8x128xf32>
    %771 = arith.mulf %766, %735 : vector<8x128xf32>
    %772 = arith.mulf %767, %734 : vector<8x128xf32>
    %773 = arith.addf %771, %772 : vector<8x128xf32>
    %cst_149 = arith.constant 5.000000e-01 : f32
    %774 = vector.broadcast %cst_149 : f32 to vector<8x128xf32>
    %775 = arith.mulf %774, %773 : vector<8x128xf32>
    %776 = arith.addf %736, %775 : vector<8x128xf32>
    %cst_150 = arith.constant 9.99999974E-6 : f32
    %777 = vector.broadcast %cst_150 : f32 to vector<8x128xf32>
    %778 = arith.addf %776, %777 : vector<8x128xf32>
    %cst_151 = arith.constant 5.000000e-01 : f32
    %779 = vector.broadcast %cst_151 : f32 to vector<8x128xf32>
    %780 = arith.mulf %779, %770 : vector<8x128xf32>
    %781 = arith.subf %739, %780 : vector<8x128xf32>
    %782 = arith.mulf %778, %778 : vector<8x128xf32>
    %783 = arith.mulf %781, %781 : vector<8x128xf32>
    %784 = arith.addf %782, %783 : vector<8x128xf32>
    %785 = tpu.reciprocal %784 {approx = true} : vector<8x128xf32> -> vector<8x128xf32>
    %786 = arith.mulf %784, %785 : vector<8x128xf32>
    %cst_152 = arith.constant 2.000000e+00 : f32
    %787 = vector.broadcast %cst_152 : f32 to vector<8x128xf32>
    %788 = arith.subf %787, %786 : vector<8x128xf32>
    %789 = arith.mulf %785, %788 : vector<8x128xf32>
    %790 = arith.mulf %763, %778 : vector<8x128xf32>
    %791 = arith.mulf %765, %781 : vector<8x128xf32>
    %792 = arith.addf %790, %791 : vector<8x128xf32>
    %793 = arith.mulf %792, %789 : vector<8x128xf32>
    %794 = arith.index_cast %103 : i32 to index
    %c0_153 = arith.constant 0 : index
    %795 = vector.load %arg12[%794, %c0_153] : memref<8x512xf32, #tpu.memory_space<vmem>>, vector<8x128xf32>
    tpu.vector_store %arg12[%794, %c0_153], %793 {strides = array<i32>} : memref<8x512xf32, #tpu.memory_space<vmem>>, vector<8x128xf32>,
    %796 = arith.mulf %765, %778 : vector<8x128xf32>
    %797 = arith.mulf %763, %781 : vector<8x128xf32>
    %798 = arith.subf %796, %797 : vector<8x128xf32>
    %799 = arith.mulf %798, %789 : vector<8x128xf32>
    %800 = arith.index_cast %103 : i32 to index
    %c128 = arith.constant 128 : index
    %801 = vector.load %arg12[%800, %c128] : memref<8x512xf32, #tpu.memory_space<vmem>>, vector<8x128xf32>
    tpu.vector_store %arg12[%800, %c128], %799 {strides = array<i32>} : memref<8x512xf32, #tpu.memory_space<vmem>>, vector<8x128xf32>,
    %802 = arith.mulf %778, %789 : vector<8x128xf32>
    %803 = arith.index_cast %103 : i32 to index
    %c256 = arith.constant 256 : index
    %804 = vector.load %arg12[%803, %c256] : memref<8x512xf32, #tpu.memory_space<vmem>>, vector<8x128xf32>
    tpu.vector_store %arg12[%803, %c256], %802 {strides = array<i32>} : memref<8x512xf32, #tpu.memory_space<vmem>>, vector<8x128xf32>,
    %cst_154 = arith.constant 0.000000e+00 : f32
    %805 = vector.broadcast %cst_154 : f32 to vector<8x128xf32>
    %806 = arith.subf %805, %781 : vector<8x128xf32>
    %807 = arith.mulf %806, %789 : vector<8x128xf32>
    %808 = arith.index_cast %103 : i32 to index
    %c384 = arith.constant 384 : index
    %809 = vector.load %arg12[%808, %c384] : memref<8x512xf32, #tpu.memory_space<vmem>>, vector<8x128xf32>
    tpu.vector_store %arg12[%808, %c384], %807 {strides = array<i32>} : memref<8x512xf32, #tpu.memory_space<vmem>>, vector<8x128xf32>,
    %c1_i32_155 = arith.constant 1 : i32
    return
  }
  func.func @transform_0(%arg0: i32) -> (i32, i32) {
    %c0_i32 = arith.constant 0 : i32
    %c0_i32_0 = arith.constant 0 : i32
    %c0_i32_1 = arith.constant 0 : i32
    return %c0_i32, %c0_i32_0 : i32, i32
  }
  func.func @transform_1(%arg0: i32) -> (i32, i32) {
    %c0_i32 = arith.constant 0 : i32
    %c0_i32_0 = arith.constant 0 : i32
    %c0_i32_1 = arith.constant 0 : i32
    return %c0_i32, %c0_i32_0 : i32, i32
  }
  func.func @transform_2(%arg0: i32) -> (i32, i32) {
    %c0_i32 = arith.constant 0 : i32
    %c0_i32_0 = arith.constant 0 : i32
    %c0_i32_1 = arith.constant 0 : i32
    return %c0_i32, %c0_i32_0 : i32, i32
  }
  func.func @transform_3(%arg0: i32) -> (i32, i32) {
    %c0_i32 = arith.constant 0 : i32
    %c0_i32_0 = arith.constant 0 : i32
    %c0_i32_1 = arith.constant 0 : i32
    return %c0_i32, %c0_i32_0 : i32, i32
  }
  func.func @transform_4(%arg0: i32) -> (i32, i32) {
    %c0_i32 = arith.constant 0 : i32
    %c0_i32_0 = arith.constant 0 : i32
    %c0_i32_1 = arith.constant 0 : i32
    return %c0_i32, %c0_i32_0 : i32, i32
  }
  func.func @transform_5(%arg0: i32) -> (i32, i32) {
    %c0_i32 = arith.constant 0 : i32
    %c0_i32_0 = arith.constant 0 : i32
    %c0_i32_1 = arith.constant 0 : i32
    return %c0_i32, %c0_i32_0 : i32, i32
  }
  func.func @transform_6(%arg0: i32) -> (i32, i32) {
    %c0_i32 = arith.constant 0 : i32
    %c0_i32_0 = arith.constant 0 : i32
    %c0_i32_1 = arith.constant 0 : i32
    return %c0_i32, %c0_i32_0 : i32, i32
  }
  func.func @transform_7(%arg0: i32) -> (i32, i32) {
    %c0_i32 = arith.constant 0 : i32
    %c0_i32_0 = arith.constant 0 : i32
    %c0_i32_1 = arith.constant 0 : i32
    return %c0_i32, %c0_i32_0 : i32, i32
  }
  func.func @transform_8(%arg0: i32) -> (i32, i32) {
    %c0_i32 = arith.constant 0 : i32
    %c0_i32_0 = arith.constant 0 : i32
    %c0_i32_1 = arith.constant 0 : i32
    return %c0_i32, %c0_i32_0 : i32, i32
  }
  func.func @transform_9(%arg0: i32) -> (i32, i32) {
    %c0_i32 = arith.constant 0 : i32
    %c0_i32_0 = arith.constant 0 : i32
    %c0_i32_1 = arith.constant 0 : i32
    return %c0_i32, %c0_i32_0 : i32, i32
  }
  func.func @transform_10(%arg0: i32) -> (i32, i32) {
    %c0_i32 = arith.constant 0 : i32
    %c0_i32_0 = arith.constant 0 : i32
    %c0_i32_1 = arith.constant 0 : i32
    return %c0_i32, %c0_i32_0 : i32, i32
  }
  func.func @transform_11(%arg0: i32) -> (i32, i32) {
    %c0_i32 = arith.constant 0 : i32
    %c0_i32_0 = arith.constant 0 : i32
    return %arg0, %c0_i32 : i32, i32
  }
}

</mosaic_0001>

<llo_original>
// kernel: custom-call
$region0: #{custom-call}
  %s0 = inlined_call_operand.vmem [shape: f32[8,128], index: 0, kind: input, shape index: {}]
  %s1 = inlined_call_operand.vmem [shape: f32[8,128], index: 1, kind: input, shape index: {}]
  %s2 = inlined_call_operand.hbm [shape: c64[8,128], index: 2, kind: output, shape index: {}]
  %s3 = scalar_lea.hbm %s2, 128
  $region1: #{custom-call} parent=0
    #allocation0 [shape = 's32[1]{0}', space=sflag, size = 0x4, scoped, tag = 'scoped memory for custom-call']
    %4 = vsyncpa [#allocation0], 0
    %s5 = sshll.u32 %s0, 4
    %s6 = int_to_ptr.vmem [resolvable:$true] %s5
    %8 = dma.vmem_to_hbm [thread:$0]  %s6, 128, %s2, [#allocation0]
    %9 = dma.done [#allocation0], 128
    %10 = vsyncpa [#allocation0], 1
  $region2: #{custom-call} parent=0
    #allocation1 [shape = 's32[1]{0}', space=sflag, size = 0x4, scoped, tag = 'scoped memory for custom-call']
    %11 = vsyncpa [#allocation1], 0
    %s12 = sshll.u32 %s1, 4
    %s13 = int_to_ptr.vmem [resolvable:$true] %s12
    %15 = dma.vmem_to_hbm [thread:$0]  %s13, 128, %s3, [#allocation1]
    %16 = dma.done [#allocation1], 128
    %17 = vsyncpa [#allocation1], 1

// kernel: lorentz_dnn_forward.1
$region0: #{lorentz_dnn_forward.1}
  #allocation0 [shape = 'u32[]', space=smem, size = 0x4, offset = 0x4, fixed_abs, tag = 'smem constant byte address 0x4 - core index']
  #allocation1 [shape = 'u32[144,128]{1,0:T(1,128)}', space=vmem, size = 0x12000, scoped, tag = 'internal scratch']
  #allocation2 [shape = 'f32[8,64]{1,0:T(8,128)}', space=vmem, size = 0x1000, scoped, tag = 'scratch operand']
  #allocation3 [shape = 'f32[8,1]{1,0:T(8,128)}', space=vmem, size = 0x1000, scoped, tag = 'scratch operand']
  %s0 = inlined_call_operand.vmem [shape: f32[8,8], index: 0, kind: input, shape index: {}]
  %s1 = inlined_call_operand.vmem [shape: f32[8,32], index: 1, kind: input, shape index: {}]
  %s2 = inlined_call_operand.vmem [shape: f32[1,32], index: 2, kind: input, shape index: {}]
  %s3 = inlined_call_operand.vmem [shape: f32[1,32], index: 3, kind: input, shape index: {}]
  %s4 = inlined_call_operand.vmem [shape: f32[1,32], index: 4, kind: input, shape index: {}]
  %s5 = inlined_call_operand.vmem [shape: f32[32,32], index: 5, kind: input, shape index: {}]
  %s6 = inlined_call_operand.vmem [shape: f32[1,32], index: 6, kind: input, shape index: {}]
  %s7 = inlined_call_operand.vmem [shape: f32[1,32], index: 7, kind: input, shape index: {}]
  %s8 = inlined_call_operand.vmem [shape: f32[1,32], index: 8, kind: input, shape index: {}]
  %s9 = inlined_call_operand.vmem [shape: f32[32,64], index: 9, kind: input, shape index: {}]
  %s10 = inlined_call_operand.vmem [shape: f32[1,64], index: 10, kind: input, shape index: {}]
  %s11 = inlined_call_operand.vmem [shape: f32[8,512], index: 11, kind: output, shape index: {}]
  %s12 = sld [smem:[#allocation0]]
  $region54: #{lorentz_dnn_forward.1} parent=0
    _
  %s14 = ssub.s32 1, %s12
  %s15 = scalar_select 0, %s14, %s12
  // Predicated region
  $region2: #{lorentz_dnn_forward.1} parent=0 // pred_check
    _
  $region3: #{lorentz_dnn_forward.1} parent=0 // pred_check_branch
    %17 = sbr.rel (0) target = $region5
  $region4: #{lorentz_dnn_forward.1} parent=0 // pred_region
    _
  $region5: #{lorentz_dnn_forward.1} parent=0 // pred_fallthru
    _
  // Predicated region
  $region6: #{lorentz_dnn_forward.1} parent=0 // pred_check
    _
  $region7: #{lorentz_dnn_forward.1} parent=0 // pred_check_branch
    %19 = sbr.rel (0) target = $region9
  $region8: #{lorentz_dnn_forward.1} parent=0 // pred_region
    _
  $region9: #{lorentz_dnn_forward.1} parent=0 // pred_fallthru
    _
  // Predicated region
  $region10: #{lorentz_dnn_forward.1} parent=0 // pred_check
    _
  $region11: #{lorentz_dnn_forward.1} parent=0 // pred_check_branch
    %21 = sbr.rel (0) target = $region13
  $region12: #{lorentz_dnn_forward.1} parent=0 // pred_region
    _
  $region13: #{lorentz_dnn_forward.1} parent=0 // pred_fallthru
    _
  // Predicated region
  $region14: #{lorentz_dnn_forward.1} parent=0 // pred_check
    _
  $region15: #{lorentz_dnn_forward.1} parent=0 // pred_check_branch
    %23 = sbr.rel (0) target = $region17
  $region16: #{lorentz_dnn_forward.1} parent=0 // pred_region
    _
  $region17: #{lorentz_dnn_forward.1} parent=0 // pred_fallthru
    _
  // Predicated region
  $region18: #{lorentz_dnn_forward.1} parent=0 // pred_check
    _
  $region19: #{lorentz_dnn_forward.1} parent=0 // pred_check_branch
    %25 = sbr.rel (0) target = $region21
  $region20: #{lorentz_dnn_forward.1} parent=0 // pred_region
    _
  $region21: #{lorentz_dnn_forward.1} parent=0 // pred_fallthru
    _
  // Predicated region
  $region22: #{lorentz_dnn_forward.1} parent=0 // pred_check
    _
  $region23: #{lorentz_dnn_forward.1} parent=0 // pred_check_branch
    %27 = sbr.rel (0) target = $region25
  $region24: #{lorentz_dnn_forward.1} parent=0 // pred_region
    _
  $region25: #{lorentz_dnn_forward.1} parent=0 // pred_fallthru
    _
  // Predicated region
  $region26: #{lorentz_dnn_forward.1} parent=0 // pred_check
    _
  $region27: #{lorentz_dnn_forward.1} parent=0 // pred_check_branch
    %29 = sbr.rel (0) target = $region29
  $region28: #{lorentz_dnn_forward.1} parent=0 // pred_region
    _
  $region29: #{lorentz_dnn_forward.1} parent=0 // pred_fallthru
    _
  // Predicated region
  $region30: #{lorentz_dnn_forward.1} parent=0 // pred_check
    _
  $region31: #{lorentz_dnn_forward.1} parent=0 // pred_check_branch
    %31 = sbr.rel (0) target = $region33
  $region32: #{lorentz_dnn_forward.1} parent=0 // pred_region
    _
  $region33: #{lorentz_dnn_forward.1} parent=0 // pred_fallthru
    _
  // Predicated region
  $region34: #{lorentz_dnn_forward.1} parent=0 // pred_check
    _
  $region35: #{lorentz_dnn_forward.1} parent=0 // pred_check_branch
    %33 = sbr.rel (0) target = $region37
  $region36: #{lorentz_dnn_forward.1} parent=0 // pred_region
    _
  $region37: #{lorentz_dnn_forward.1} parent=0 // pred_fallthru
    _
  // Predicated region
  $region38: #{lorentz_dnn_forward.1} parent=0 // pred_check
    _
  $region39: #{lorentz_dnn_forward.1} parent=0 // pred_check_branch
    %35 = sbr.rel (0) target = $region41
  $region40: #{lorentz_dnn_forward.1} parent=0 // pred_region
    _
  $region41: #{lorentz_dnn_forward.1} parent=0 // pred_fallthru
    _
  // Predicated region
  $region42: #{lorentz_dnn_forward.1} parent=0 // pred_check
    _
  $region43: #{lorentz_dnn_forward.1} parent=0 // pred_check_branch
    %37 = sbr.rel (0) target = $region45
  $region44: #{lorentz_dnn_forward.1} parent=0 // pred_region
    _
  $region45: #{lorentz_dnn_forward.1} parent=0 // pred_fallthru
    _
  %v38 = vld [vmem:[%s0] sm:$0xff]
  %v39 = vld [vmem:[%s1] sm:$0xff]
  %v40 = vld [vmem:[%s2] sm:$0x1]
  %v42 = vlaneseq
  %v43 = vshrl.u32 %v42, 7
  %v44 = vsub.s32 0, %v43
  %v45 = vrot.slane %v40, %v44
  %vm47 = vcmask 64512
  %v49 = vsel %vm47, %v38, 0
  %51 = vmatprep.subr.mxu0 0.0
  %52 = vmatpush1.msra.mxu0 0.0
  %53 = vmatprep.subr.mxu0 0.0
  %54 = vmatpush1.msra.mxu0 0.0
  %55 = vmatprep.subr.mxu0 0.0
  %56 = vmatpush1.msra.mxu0 0.0
  %57 = vmatprep.subr.mxu0 0.0
  %58 = vmatpush1.msra.mxu0 0.0
  %59 = vmatprep.subr.mxu0 0.0
  %60 = vmatpush1.msra.mxu0 0.0
  %61 = vmatprep.subr.mxu0 0.0
  %62 = vmatpush1.msra.mxu0 0.0
  %63 = vmatprep.subr.mxu0 0.0
  %64 = vmatpush1.msra.mxu0 0.0
  %65 = vmatprep.subr.mxu0 0.0
  %66 = vmatpush1.msra.mxu0 0.0
  %67 = vmatprep.subr.mxu0 0.0
  %68 = vmatpush1.msra.mxu0 0.0
  %69 = vmatprep.subr.mxu0 0.0
  %70 = vmatpush1.msra.mxu0 0.0
  %71 = vmatprep.subr.mxu0 0.0
  %72 = vmatpush1.msra.mxu0 0.0
  %73 = vmatprep.subr.mxu0 0.0
  %74 = vmatpush1.msra.mxu0 0.0
  %75 = vmatprep.subr.mxu0 0.0
  %76 = vmatpush1.msra.mxu0 0.0
  %77 = vmatprep.subr.mxu0 0.0
  %78 = vmatpush1.msra.mxu0 0.0
  %79 = vmatprep.subr.mxu0 0.0
  %80 = vmatpush1.msra.mxu0 0.0
  %81 = vmatprep.subr.mxu0 0.0
  %82 = vmatpush1.msra.mxu0 %v39
  %83 = vmatprep.subr.mxu0 0.0
  %84 = vmatpush2.msra.mxu0 0.0
  %85 = vmatprep.subr.mxu0 0.0
  %86 = vmatpush2.msra.mxu0 0.0
  %87 = vmatprep.subr.mxu0 0.0
  %88 = vmatpush2.msra.mxu0 0.0
  %89 = vmatprep.subr.mxu0 0.0
  %90 = vmatpush2.msra.mxu0 0.0
  %91 = vmatprep.subr.mxu0 0.0
  %92 = vmatpush2.msra.mxu0 0.0
  %93 = vmatprep.subr.mxu0 0.0
  %94 = vmatpush2.msra.mxu0 0.0
  %95 = vmatprep.subr.mxu0 0.0
  %96 = vmatpush2.msra.mxu0 0.0
  %97 = vmatprep.subr.mxu0 0.0
  %98 = vmatpush2.msra.mxu0 0.0
  %99 = vmatprep.subr.mxu0 0.0
  %100 = vmatpush2.msra.mxu0 0.0
  %101 = vmatprep.subr.mxu0 0.0
  %102 = vmatpush2.msra.mxu0 0.0
  %103 = vmatprep.subr.mxu0 0.0
  %104 = vmatpush2.msra.mxu0 0.0
  %105 = vmatprep.subr.mxu0 0.0
  %106 = vmatpush2.msra.mxu0 0.0
  %107 = vmatprep.subr.mxu0 0.0
  %108 = vmatpush2.msra.mxu0 0.0
  %109 = vmatprep.subr.mxu0 0.0
  %110 = vmatpush2.msra.mxu0 0.0
  %111 = vmatprep.subr.mxu0 0.0
  %112 = vmatpush2.msra.mxu0 0.0
  %113 = vmatprep.subr.mxu0 0.0
  %114 = vmatpush2.msra.mxu0 0.0
  %115 = vmatprep.mubr.f32.mxu0 0.0
  %116 = vmatmul.mubr.f32.gmra.mxu0 %v49
  %v117 = vpop.f32.mrf.mxu0
  %v118 = vadd.f32 %v45, %v117
  %v119 = vpop.f32.mrf.mxu0
  %120 = vdwg.mxu0
  %vm121 = vcmask 261120
  %v122 = vsel %vm121, %v118, 0.0
  %v123 = vrot.slane %v122, 4
  %v124 = vadd.f32 %v122, %v123
  %v125 = vrot.slane %v124, 2
  %v126 = vadd.f32 %v124, %v125
  %v127 = vrot.slane %v126, 1
  %v128 = vadd.f32 %v126, %v127
  %v129 = vrcp.pop 8.0
  %v130 = vmul.f32 %v128, %v129
  %v131 = vsub.f32 %v118, %v130
  %v132 = vmul.f32 %v131, %v131
  %v133 = vsel %vm121, %v132, 0.0
  %v134 = vrot.slane %v133, 4
  %v135 = vadd.f32 %v133, %v134
  %v136 = vrot.slane %v135, 2
  %v137 = vadd.f32 %v135, %v136
  %v138 = vrot.slane %v137, 1
  %v139 = vadd.f32 %v137, %v138
  %v140 = vmul.f32 %v139, %v129
  %v141 = vadd.f32 %v140, 1e-05
  %v142 = vrsqrt.pop %v141
  %v143 = vmul.f32 %v131, %v142
  %v144 = vld [vmem:[%s3] sm:$0x1]
  %v146 = vlaneseq
  %v147 = vshrl.u32 %v146, 7
  %v148 = vsub.s32 0, %v147
  %v149 = vrot.slane %v144, %v148
  %v151 = vmul.f32 %v143, %v149
  %v152 = vld [vmem:[%s4] sm:$0x1]
  %v154 = vlaneseq
  %v155 = vshrl.u32 %v154, 7
  %v156 = vsub.s32 0, %v155
  %v157 = vrot.slane %v152, %v156
  %v159 = vadd.f32 %v151, %v157
  %vm160 = vcmp.gt.f32.partialorder %v159, 0.0
  %v161 = vmul.f32 %v159, 0.01
  %v162 = vsel %vm160, %v159, %v161
  %v163 = vld [vmem:[%s5] sm:$0xff]
  %v164 = vld [vmem:[%s5 + $0x8] sm:$0xff]
  %v165 = vld [vmem:[%s5 + $0x10] sm:$0xff]
  %v166 = vld [vmem:[%s5 + $0x18] sm:$0xff]
  %v167 = vld [vmem:[%s6] sm:$0x1]
  %v169 = vlaneseq
  %v170 = vshrl.u32 %v169, 7
  %v171 = vsub.s32 0, %v170
  %v172 = vrot.slane %v167, %v171
  %v175 = vsel %vm121, %v162, 0
  %177 = vmatprep.subr.mxu0 0.0
  %178 = vmatpush1.msra.mxu0 0.0
  %179 = vmatprep.subr.mxu0 0.0
  %180 = vmatpush1.msra.mxu0 0.0
  %181 = vmatprep.subr.mxu0 0.0
  %182 = vmatpush1.msra.mxu0 0.0
  %183 = vmatprep.subr.mxu0 0.0
  %184 = vmatpush1.msra.mxu0 0.0
  %185 = vmatprep.subr.mxu0 0.0
  %186 = vmatpush1.msra.mxu0 0.0
  %187 = vmatprep.subr.mxu0 0.0
  %188 = vmatpush1.msra.mxu0 0.0
  %189 = vmatprep.subr.mxu0 0.0
  %190 = vmatpush1.msra.mxu0 0.0
  %191 = vmatprep.subr.mxu0 0.0
  %192 = vmatpush1.msra.mxu0 0.0
  %193 = vmatprep.subr.mxu0 0.0
  %194 = vmatpush1.msra.mxu0 0.0
  %195 = vmatprep.subr.mxu0 0.0
  %196 = vmatpush1.msra.mxu0 0.0
  %197 = vmatprep.subr.mxu0 0.0
  %198 = vmatpush1.msra.mxu0 0.0
  %199 = vmatprep.subr.mxu0 0.0
  %200 = vmatpush1.msra.mxu0 0.0
  %201 = vmatprep.subr.mxu0 0.0
  %202 = vmatpush1.msra.mxu0 %v166
  %203 = vmatprep.subr.mxu0 0.0
  %204 = vmatpush1.msra.mxu0 %v165
  %205 = vmatprep.subr.mxu0 0.0
  %206 = vmatpush1.msra.mxu0 %v164
  %207 = vmatprep.subr.mxu0 0.0
  %208 = vmatpush1.msra.mxu0 %v163
  %209 = vmatprep.subr.mxu0 0.0
  %210 = vmatpush2.msra.mxu0 0.0
  %211 = vmatprep.subr.mxu0 0.0
  %212 = vmatpush2.msra.mxu0 0.0
  %213 = vmatprep.subr.mxu0 0.0
  %214 = vmatpush2.msra.mxu0 0.0
  %215 = vmatprep.subr.mxu0 0.0
  %216 = vmatpush2.msra.mxu0 0.0
  %217 = vmatprep.subr.mxu0 0.0
  %218 = vmatpush2.msra.mxu0 0.0
  %219 = vmatprep.subr.mxu0 0.0
  %220 = vmatpush2.msra.mxu0 0.0
  %221 = vmatprep.subr.mxu0 0.0
  %222 = vmatpush2.msra.mxu0 0.0
  %223 = vmatprep.subr.mxu0 0.0
  %224 = vmatpush2.msra.mxu0 0.0
  %225 = vmatprep.subr.mxu0 0.0
  %226 = vmatpush2.msra.mxu0 0.0
  %227 = vmatprep.subr.mxu0 0.0
  %228 = vmatpush2.msra.mxu0 0.0
  %229 = vmatprep.subr.mxu0 0.0
  %230 = vmatpush2.msra.mxu0 0.0
  %231 = vmatprep.subr.mxu0 0.0
  %232 = vmatpush2.msra.mxu0 0.0
  %233 = vmatprep.subr.mxu0 0.0
  %234 = vmatpush2.msra.mxu0 0.0
  %235 = vmatprep.subr.mxu0 0.0
  %236 = vmatpush2.msra.mxu0 0.0
  %237 = vmatprep.subr.mxu0 0.0
  %238 = vmatpush2.msra.mxu0 0.0
  %239 = vmatprep.subr.mxu0 0.0
  %240 = vmatpush2.msra.mxu0 0.0
  %241 = vmatprep.mubr.f32.mxu0 0.0
  %242 = vmatmul.mubr.f32.gmra.mxu0 %v175
  %v243 = vpop.f32.mrf.mxu0
  %v244 = vadd.f32 %v172, %v243
  %v245 = vpop.f32.mrf.mxu0
  %246 = vdwg.mxu0
  %v247 = vsel %vm121, %v244, 0.0
  %v248 = vrot.slane %v247, 4
  %v249 = vadd.f32 %v247, %v248
  %v250 = vrot.slane %v249, 2
  %v251 = vadd.f32 %v249, %v250
  %v252 = vrot.slane %v251, 1
  %v253 = vadd.f32 %v251, %v252
  %v254 = vmul.f32 %v253, %v129
  %v255 = vsub.f32 %v244, %v254
  %v256 = vmul.f32 %v255, %v255
  %v257 = vsel %vm121, %v256, 0.0
  %v258 = vrot.slane %v257, 4
  %v259 = vadd.f32 %v257, %v258
  %v260 = vrot.slane %v259, 2
  %v261 = vadd.f32 %v259, %v260
  %v262 = vrot.slane %v261, 1
  %v263 = vadd.f32 %v261, %v262
  %v264 = vmul.f32 %v263, %v129
  %v265 = vadd.f32 %v264, 1e-05
  %v266 = vrsqrt.pop %v265
  %v267 = vmul.f32 %v255, %v266
  %v268 = vld [vmem:[%s7] sm:$0x1]
  %v270 = vlaneseq
  %v271 = vshrl.u32 %v270, 7
  %v272 = vsub.s32 0, %v271
  %v273 = vrot.slane %v268, %v272
  %v275 = vmul.f32 %v267, %v273
  %v276 = vld [vmem:[%s8] sm:$0x1]
  %v278 = vlaneseq
  %v279 = vshrl.u32 %v278, 7
  %v280 = vsub.s32 0, %v279
  %v281 = vrot.slane %v276, %v280
  %v283 = vadd.f32 %v275, %v281
  %vm284 = vcmp.gt.f32.partialorder %v283, 0.0
  %v285 = vmul.f32 %v283, 0.01
  %v286 = vsel %vm284, %v283, %v285
  %vm287 = vcmp.gt.f32.partialorder %v286, 0.0
  %v288 = vmul.f32 %v286, 0.01
  %v289 = vsel %vm287, %v286, %v288
  %v290 = vld [vmem:[%s9] sm:$0xff]
  %v291 = vld [vmem:[%s9 + $0x8] sm:$0xff]
  %v292 = vld [vmem:[%s9 + $0x10] sm:$0xff]
  %v293 = vld [vmem:[%s9 + $0x18] sm:$0xff]
  %v294 = vld [vmem:[%s10] sm:$0x1]
  %v296 = vlaneseq
  %v297 = vshrl.u32 %v296, 7
  %v298 = vsub.s32 0, %v297
  %v299 = vrot.slane %v294, %v298
  %v302 = vsel %vm121, %v289, 0
  %304 = vmatprep.subr.mxu0 0.0
  %305 = vmatpush1.msra.mxu0 0.0
  %306 = vmatprep.subr.mxu0 0.0
  %307 = vmatpush1.msra.mxu0 0.0
  %308 = vmatprep.subr.mxu0 0.0
  %309 = vmatpush1.msra.mxu0 0.0
  %310 = vmatprep.subr.mxu0 0.0
  %311 = vmatpush1.msra.mxu0 0.0
  %312 = vmatprep.subr.mxu0 0.0
  %313 = vmatpush1.msra.mxu0 0.0
  %314 = vmatprep.subr.mxu0 0.0
  %315 = vmatpush1.msra.mxu0 0.0
  %316 = vmatprep.subr.mxu0 0.0
  %317 = vmatpush1.msra.mxu0 0.0
  %318 = vmatprep.subr.mxu0 0.0
  %319 = vmatpush1.msra.mxu0 0.0
  %320 = vmatprep.subr.mxu0 0.0
  %321 = vmatpush1.msra.mxu0 0.0
  %322 = vmatprep.subr.mxu0 0.0
  %323 = vmatpush1.msra.mxu0 0.0
  %324 = vmatprep.subr.mxu0 0.0
  %325 = vmatpush1.msra.mxu0 0.0
  %326 = vmatprep.subr.mxu0 0.0
  %327 = vmatpush1.msra.mxu0 0.0
  %328 = vmatprep.subr.mxu0 0.0
  %329 = vmatpush1.msra.mxu0 %v293
  %330 = vmatprep.subr.mxu0 0.0
  %331 = vmatpush1.msra.mxu0 %v292
  %332 = vmatprep.subr.mxu0 0.0
  %333 = vmatpush1.msra.mxu0 %v291
  %334 = vmatprep.subr.mxu0 0.0
  %335 = vmatpush1.msra.mxu0 %v290
  %336 = vmatprep.subr.mxu0 0.0
  %337 = vmatpush2.msra.mxu0 0.0
  %338 = vmatprep.subr.mxu0 0.0
  %339 = vmatpush2.msra.mxu0 0.0
  %340 = vmatprep.subr.mxu0 0.0
  %341 = vmatpush2.msra.mxu0 0.0
  %342 = vmatprep.subr.mxu0 0.0
  %343 = vmatpush2.msra.mxu0 0.0
  %344 = vmatprep.subr.mxu0 0.0
  %345 = vmatpush2.msra.mxu0 0.0
  %346 = vmatprep.subr.mxu0 0.0
  %347 = vmatpush2.msra.mxu0 0.0
  %348 = vmatprep.subr.mxu0 0.0
  %349 = vmatpush2.msra.mxu0 0.0
  %350 = vmatprep.subr.mxu0 0.0
  %351 = vmatpush2.msra.mxu0 0.0
  %352 = vmatprep.subr.mxu0 0.0
  %353 = vmatpush2.msra.mxu0 0.0
  %354 = vmatprep.subr.mxu0 0.0
  %355 = vmatpush2.msra.mxu0 0.0
  %356 = vmatprep.subr.mxu0 0.0
  %357 = vmatpush2.msra.mxu0 0.0
  %358 = vmatprep.subr.mxu0 0.0
  %359 = vmatpush2.msra.mxu0 0.0
  %360 = vmatprep.subr.mxu0 0.0
  %361 = vmatpush2.msra.mxu0 0.0
  %362 = vmatprep.subr.mxu0 0.0
  %363 = vmatpush2.msra.mxu0 0.0
  %364 = vmatprep.subr.mxu0 0.0
  %365 = vmatpush2.msra.mxu0 0.0
  %366 = vmatprep.subr.mxu0 0.0
  %367 = vmatpush2.msra.mxu0 0.0
  %368 = vmatprep.mubr.f32.mxu0 0.0
  %369 = vmatmul.mubr.f32.gmra.mxu0 %v302
  %v370 = vpop.f32.mrf.mxu0
  %v371 = vadd.f32 %v299, %v370
  %v372 = vpop.f32.mrf.mxu0
  %373 = vdwg.mxu0
  %vm374 = vcmp.gt.f32.partialorder %v371, 0.0
  %v375 = vmul.f32 %v371, 0.01
  %v376 = vsel %vm374, %v371, %v375
  %v377 = vand.u32 2147483647, %v376
  %vm378 = vcmask 523264
  %379 = vst.msk [vmem:[#allocation2] sm:$0xff] %vm378, %v377
  %v380 = vld [vmem:[%s0] sm:$0xff]
  %v381 = vmul.f32 %v380, 1.25
  %v382 = vadd.f32 %v381, 1.75
  %384 = vrot.lane.b32.xlu0 %v382, 127
  %v385 = vpop.permute.xlu0 %384
  %vm387 = vcmask 7168
  %388 = vst.msk [vmem:[#allocation3] sm:$0xff] %vm387, %v385
  %v389 = vlaneseq
  %v390 = vand.u32 %v389, 127
  %v391 = vcvt.s32.f32 %v390
  %v392 = vmul.f32 %v391, 0.03515625
  %v393 = vadd.f32 %v392, 0.5
  %v394 = vmul.f32 %v393, %v393
  %s395 = smul.u32 0, 8
  %s396 = scalar_lea.vmem [#allocation2], %s395
  %v397 = vld [vmem:[%s396] sm:$0xff]
  %s398 = scalar_lea.vmem [#allocation3], %s395
  %v399 = vld [vmem:[%s398] sm:$0xff]
  %v400 = vmul.f32 %v397, %v397
  %v401 = vadd.f32 %v397, 1.0
  %403 = vset.pattern.permute.xlu0 48
  %404 = vperm.xlu0 %403, %v401
  %v405 = vpop.permute.xlu0 %404
  %407 = vset.pattern.permute.xlu0 49
  %408 = vperm.xlu0 %407, %v401
  %v409 = vpop.permute.xlu0 %408
  %412 = vset.pattern.permute.xlu0 0
  %413 = vperm.xlu0 %412, %v400
  %v414 = vpop.permute.xlu0 %413
  %v416 = vsub.f32 %v414, %v394
  %v417 = vmul.f32 %v416, %v416
  %418 = vset.pattern.permute.xlu0 16
  %419 = vperm.xlu0 %418, %v400
  %v420 = vpop.permute.xlu0 %419
  %v422 = vmul.f32 %v394, %v420
  %v423 = vadd.f32 %v417, %v422
  %v424 = vadd.f32 %v423, 1e-05
  %v425 = vrcp.pop %v424
  %426 = vset.pattern.permute.xlu0 8
  %427 = vperm.xlu0 %426, %v400
  %v428 = vpop.permute.xlu0 %427
  %v430 = vmul.f32 %v428, %v425
  %v431 = vmul.f32 %v430, %v416
  %v432 = vadd.f32 %v405, %v431
  %434 = vset.pattern.permute.xlu0 16
  %435 = vperm.xlu0 %434, %v397
  %v436 = vpop.permute.xlu0 %435
  %v438 = vmul.f32 %v430, %v436
  %v439 = vadd.f32 %v438, 0.0
  %440 = vset.pattern.permute.xlu0 24
  %441 = vperm.xlu0 %440, %v400
  %v442 = vpop.permute.xlu0 %441
  %v444 = vsub.f32 %v442, %v394
  %v445 = vmul.f32 %v444, %v444
  %446 = vset.pattern.permute.xlu0 40
  %447 = vperm.xlu0 %446, %v400
  %v448 = vpop.permute.xlu0 %447
  %v450 = vmul.f32 %v394, %v448
  %v451 = vadd.f32 %v445, %v450
  %v452 = vadd.f32 %v451, 1e-05
  %v453 = vrcp.pop %v452
  %454 = vset.pattern.permute.xlu0 32
  %455 = vperm.xlu0 %454, %v400
  %v456 = vpop.permute.xlu0 %455
  %v458 = vmul.f32 %v456, %v453
  %v459 = vmul.f32 %v458, %v444
  %v460 = vadd.f32 %v409, %v459
  %461 = vset.pattern.permute.xlu0 40
  %462 = vperm.xlu0 %461, %v397
  %v463 = vpop.permute.xlu0 %462
  %v465 = vmul.f32 %v458, %v463
  %v466 = vadd.f32 %v465, 0.0
  %467 = vset.pattern.permute.xlu0 1
  %468 = vperm.xlu0 %467, %v400
  %v469 = vpop.permute.xlu0 %468
  %v471 = vsub.f32 %v469, %v394
  %v472 = vmul.f32 %v471, %v471
  %473 = vset.pattern.permute.xlu0 17
  %474 = vperm.xlu0 %473, %v400
  %v475 = vpop.permute.xlu0 %474
  %v477 = vmul.f32 %v394, %v475
  %v478 = vadd.f32 %v472, %v477
  %v479 = vadd.f32 %v478, 1e-05
  %v480 = vrcp.pop %v479
  %481 = vset.pattern.permute.xlu0 9
  %482 = vperm.xlu0 %481, %v400
  %v483 = vpop.permute.xlu0 %482
  %v485 = vmul.f32 %v483, %v480
  %v486 = vmul.f32 %v485, %v471
  %v487 = vadd.f32 %v432, %v486
  %488 = vset.pattern.permute.xlu0 17
  %489 = vperm.xlu0 %488, %v397
  %v490 = vpop.permute.xlu0 %489
  %v492 = vmul.f32 %v485, %v490
  %v493 = vadd.f32 %v439, %v492
  %494 = vset.pattern.permute.xlu0 25
  %495 = vperm.xlu0 %494, %v400
  %v496 = vpop.permute.xlu0 %495
  %v498 = vsub.f32 %v496, %v394
  %v499 = vmul.f32 %v498, %v498
  %500 = vset.pattern.permute.xlu0 41
  %501 = vperm.xlu0 %500, %v400
  %v502 = vpop.permute.xlu0 %501
  %v504 = vmul.f32 %v394, %v502
  %v505 = vadd.f32 %v499, %v504
  %v506 = vadd.f32 %v505, 1e-05
  %v507 = vrcp.pop %v506
  %508 = vset.pattern.permute.xlu0 33
  %509 = vperm.xlu0 %508, %v400
  %v510 = vpop.permute.xlu0 %509
  %v512 = vmul.f32 %v510, %v507
  %v513 = vmul.f32 %v512, %v498
  %v514 = vadd.f32 %v460, %v513
  %515 = vset.pattern.permute.xlu0 41
  %516 = vperm.xlu0 %515, %v397
  %v517 = vpop.permute.xlu0 %516
  %v519 = vmul.f32 %v512, %v517
  %v520 = vadd.f32 %v466, %v519
  %521 = vset.pattern.permute.xlu0 2
  %522 = vperm.xlu0 %521, %v400
  %v523 = vpop.permute.xlu0 %522
  %v525 = vsub.f32 %v523, %v394
  %v526 = vmul.f32 %v525, %v525
  %527 = vset.pattern.permute.xlu0 18
  %528 = vperm.xlu0 %527, %v400
  %v529 = vpop.permute.xlu0 %528
  %v531 = vmul.f32 %v394, %v529
  %v532 = vadd.f32 %v526, %v531
  %v533 = vadd.f32 %v532, 1e-05
  %v534 = vrcp.pop %v533
  %535 = vset.pattern.permute.xlu0 10
  %536 = vperm.xlu0 %535, %v400
  %v537 = vpop.permute.xlu0 %536
  %v539 = vmul.f32 %v537, %v534
  %v540 = vmul.f32 %v539, %v525
  %v541 = vadd.f32 %v487, %v540
  %542 = vset.pattern.permute.xlu0 18
  %543 = vperm.xlu0 %542, %v397
  %v544 = vpop.permute.xlu0 %543
  %v546 = vmul.f32 %v539, %v544
  %v547 = vadd.f32 %v493, %v546
  %548 = vset.pattern.permute.xlu0 26
  %549 = vperm.xlu0 %548, %v400
  %v550 = vpop.permute.xlu0 %549
  %v552 = vsub.f32 %v550, %v394
  %v553 = vmul.f32 %v552, %v552
  %554 = vset.pattern.permute.xlu0 42
  %555 = vperm.xlu0 %554, %v400
  %v556 = vpop.permute.xlu0 %555
  %v558 = vmul.f32 %v394, %v556
  %v559 = vadd.f32 %v553, %v558
  %v560 = vadd.f32 %v559, 1e-05
  %v561 = vrcp.pop %v560
  %562 = vset.pattern.permute.xlu0 34
  %563 = vperm.xlu0 %562, %v400
  %v564 = vpop.permute.xlu0 %563
  %v566 = vmul.f32 %v564, %v561
  %v567 = vmul.f32 %v566, %v552
  %v568 = vadd.f32 %v514, %v567
  %569 = vset.pattern.permute.xlu0 42
  %570 = vperm.xlu0 %569, %v397
  %v571 = vpop.permute.xlu0 %570
  %v573 = vmul.f32 %v566, %v571
  %v574 = vadd.f32 %v520, %v573
  %575 = vset.pattern.permute.xlu0 3
  %576 = vperm.xlu0 %575, %v400
  %v577 = vpop.permute.xlu0 %576
  %v579 = vsub.f32 %v577, %v394
  %v580 = vmul.f32 %v579, %v579
  %581 = vset.pattern.permute.xlu0 19
  %582 = vperm.xlu0 %581, %v400
  %v583 = vpop.permute.xlu0 %582
  %v585 = vmul.f32 %v394, %v583
  %v586 = vadd.f32 %v580, %v585
  %v587 = vadd.f32 %v586, 1e-05
  %v588 = vrcp.pop %v587
  %589 = vset.pattern.permute.xlu0 11
  %590 = vperm.xlu0 %589, %v400
  %v591 = vpop.permute.xlu0 %590
  %v593 = vmul.f32 %v591, %v588
  %v594 = vmul.f32 %v593, %v579
  %v595 = vadd.f32 %v541, %v594
  %596 = vset.pattern.permute.xlu0 19
  %597 = vperm.xlu0 %596, %v397
  %v598 = vpop.permute.xlu0 %597
  %v600 = vmul.f32 %v593, %v598
  %v601 = vadd.f32 %v547, %v600
  %602 = vset.pattern.permute.xlu0 27
  %603 = vperm.xlu0 %602, %v400
  %v604 = vpop.permute.xlu0 %603
  %v606 = vsub.f32 %v604, %v394
  %v607 = vmul.f32 %v606, %v606
  %608 = vset.pattern.permute.xlu0 43
  %609 = vperm.xlu0 %608, %v400
  %v610 = vpop.permute.xlu0 %609
  %v612 = vmul.f32 %v394, %v610
  %v613 = vadd.f32 %v607, %v612
  %v614 = vadd.f32 %v613, 1e-05
  %v615 = vrcp.pop %v614
  %616 = vset.pattern.permute.xlu0 35
  %617 = vperm.xlu0 %616, %v400
  %v618 = vpop.permute.xlu0 %617
  %v620 = vmul.f32 %v618, %v615
  %v621 = vmul.f32 %v620, %v606
  %v622 = vadd.f32 %v568, %v621
  %623 = vset.pattern.permute.xlu0 43
  %624 = vperm.xlu0 %623, %v397
  %v625 = vpop.permute.xlu0 %624
  %v627 = vmul.f32 %v620, %v625
  %v628 = vadd.f32 %v574, %v627
  %629 = vset.pattern.permute.xlu0 4
  %630 = vperm.xlu0 %629, %v400
  %v631 = vpop.permute.xlu0 %630
  %v633 = vsub.f32 %v631, %v394
  %v634 = vmul.f32 %v633, %v633
  %635 = vset.pattern.permute.xlu0 20
  %636 = vperm.xlu0 %635, %v400
  %v637 = vpop.permute.xlu0 %636
  %v639 = vmul.f32 %v394, %v637
  %v640 = vadd.f32 %v634, %v639
  %v641 = vadd.f32 %v640, 1e-05
  %v642 = vrcp.pop %v641
  %643 = vset.pattern.permute.xlu0 12
  %644 = vperm.xlu0 %643, %v400
  %v645 = vpop.permute.xlu0 %644
  %v647 = vmul.f32 %v645, %v642
  %v648 = vmul.f32 %v647, %v633
  %v649 = vadd.f32 %v595, %v648
  %650 = vset.pattern.permute.xlu0 20
  %651 = vperm.xlu0 %650, %v397
  %v652 = vpop.permute.xlu0 %651
  %v654 = vmul.f32 %v647, %v652
  %v655 = vadd.f32 %v601, %v654
  %656 = vset.pattern.permute.xlu0 28
  %657 = vperm.xlu0 %656, %v400
  %v658 = vpop.permute.xlu0 %657
  %v660 = vsub.f32 %v658, %v394
  %v661 = vmul.f32 %v660, %v660
  %662 = vset.pattern.permute.xlu0 44
  %663 = vperm.xlu0 %662, %v400
  %v664 = vpop.permute.xlu0 %663
  %v666 = vmul.f32 %v394, %v664
  %v667 = vadd.f32 %v661, %v666
  %v668 = vadd.f32 %v667, 1e-05
  %v669 = vrcp.pop %v668
  %670 = vset.pattern.permute.xlu0 36
  %671 = vperm.xlu0 %670, %v400
  %v672 = vpop.permute.xlu0 %671
  %v674 = vmul.f32 %v672, %v669
  %v675 = vmul.f32 %v674, %v660
  %v676 = vadd.f32 %v622, %v675
  %677 = vset.pattern.permute.xlu0 44
  %678 = vperm.xlu0 %677, %v397
  %v679 = vpop.permute.xlu0 %678
  %v681 = vmul.f32 %v674, %v679
  %v682 = vadd.f32 %v628, %v681
  %683 = vset.pattern.permute.xlu0 5
  %684 = vperm.xlu0 %683, %v400
  %v685 = vpop.permute.xlu0 %684
  %v687 = vsub.f32 %v685, %v394
  %v688 = vmul.f32 %v687, %v687
  %689 = vset.pattern.permute.xlu0 21
  %690 = vperm.xlu0 %689, %v400
  %v691 = vpop.permute.xlu0 %690
  %v693 = vmul.f32 %v394, %v691
  %v694 = vadd.f32 %v688, %v693
  %v695 = vadd.f32 %v694, 1e-05
  %v696 = vrcp.pop %v695
  %697 = vset.pattern.permute.xlu0 13
  %698 = vperm.xlu0 %697, %v400
  %v699 = vpop.permute.xlu0 %698
  %v701 = vmul.f32 %v699, %v696
  %v702 = vmul.f32 %v701, %v687
  %v703 = vadd.f32 %v649, %v702
  %704 = vset.pattern.permute.xlu0 21
  %705 = vperm.xlu0 %704, %v397
  %v706 = vpop.permute.xlu0 %705
  %v708 = vmul.f32 %v701, %v706
  %v709 = vadd.f32 %v655, %v708
  %710 = vset.pattern.permute.xlu0 29
  %711 = vperm.xlu0 %710, %v400
  %v712 = vpop.permute.xlu0 %711
  %v714 = vsub.f32 %v712, %v394
  %v715 = vmul.f32 %v714, %v714
  %716 = vset.pattern.permute.xlu0 45
  %717 = vperm.xlu0 %716, %v400
  %v718 = vpop.permute.xlu0 %717
  %v720 = vmul.f32 %v394, %v718
  %v721 = vadd.f32 %v715, %v720
  %v722 = vadd.f32 %v721, 1e-05
  %v723 = vrcp.pop %v722
  %724 = vset.pattern.permute.xlu0 37
  %725 = vperm.xlu0 %724, %v400
  %v726 = vpop.permute.xlu0 %725
  %v728 = vmul.f32 %v726, %v723
  %v729 = vmul.f32 %v728, %v714
  %v730 = vadd.f32 %v676, %v729
  %731 = vset.pattern.permute.xlu0 45
  %732 = vperm.xlu0 %731, %v397
  %v733 = vpop.permute.xlu0 %732
  %v735 = vmul.f32 %v728, %v733
  %v736 = vadd.f32 %v682, %v735
  %737 = vset.pattern.permute.xlu0 6
  %738 = vperm.xlu0 %737, %v400
  %v739 = vpop.permute.xlu0 %738
  %v741 = vsub.f32 %v739, %v394
  %v742 = vmul.f32 %v741, %v741
  %743 = vset.pattern.permute.xlu0 22
  %744 = vperm.xlu0 %743, %v400
  %v745 = vpop.permute.xlu0 %744
  %v747 = vmul.f32 %v394, %v745
  %v748 = vadd.f32 %v742, %v747
  %v749 = vadd.f32 %v748, 1e-05
  %v750 = vrcp.pop %v749
  %751 = vset.pattern.permute.xlu0 14
  %752 = vperm.xlu0 %751, %v400
  %v753 = vpop.permute.xlu0 %752
  %v755 = vmul.f32 %v753, %v750
  %v756 = vmul.f32 %v755, %v741
  %v757 = vadd.f32 %v703, %v756
  %758 = vset.pattern.permute.xlu0 22
  %759 = vperm.xlu0 %758, %v397
  %v760 = vpop.permute.xlu0 %759
  %v762 = vmul.f32 %v755, %v760
  %v763 = vadd.f32 %v709, %v762
  %764 = vset.pattern.permute.xlu0 30
  %765 = vperm.xlu0 %764, %v400
  %v766 = vpop.permute.xlu0 %765
  %v768 = vsub.f32 %v766, %v394
  %v769 = vmul.f32 %v768, %v768
  %770 = vset.pattern.permute.xlu0 46
  %771 = vperm.xlu0 %770, %v400
  %v772 = vpop.permute.xlu0 %771
  %v774 = vmul.f32 %v394, %v772
  %v775 = vadd.f32 %v769, %v774
  %v776 = vadd.f32 %v775, 1e-05
  %v777 = vrcp.pop %v776
  %778 = vset.pattern.permute.xlu0 38
  %779 = vperm.xlu0 %778, %v400
  %v780 = vpop.permute.xlu0 %779
  %v782 = vmul.f32 %v780, %v777
  %v783 = vmul.f32 %v782, %v768
  %v784 = vadd.f32 %v730, %v783
  %785 = vset.pattern.permute.xlu0 46
  %786 = vperm.xlu0 %785, %v397
  %v787 = vpop.permute.xlu0 %786
  %v789 = vmul.f32 %v782, %v787
  %v790 = vadd.f32 %v736, %v789
  %791 = vset.pattern.permute.xlu0 7
  %792 = vperm.xlu0 %791, %v400
  %v793 = vpop.permute.xlu0 %792
  %v795 = vsub.f32 %v793, %v394
  %v796 = vmul.f32 %v795, %v795
  %797 = vset.pattern.permute.xlu0 23
  %798 = vperm.xlu0 %797, %v400
  %v799 = vpop.permute.xlu0 %798
  %v801 = vmul.f32 %v394, %v799
  %v802 = vadd.f32 %v796, %v801
  %v803 = vadd.f32 %v802, 1e-05
  %v804 = vrcp.pop %v803
  %805 = vset.pattern.permute.xlu0 15
  %806 = vperm.xlu0 %805, %v400
  %v807 = vpop.permute.xlu0 %806
  %v809 = vmul.f32 %v807, %v804
  %v810 = vmul.f32 %v809, %v795
  %v811 = vadd.f32 %v757, %v810
  %812 = vset.pattern.permute.xlu0 23
  %813 = vperm.xlu0 %812, %v397
  %v814 = vpop.permute.xlu0 %813
  %v816 = vmul.f32 %v809, %v814
  %v817 = vadd.f32 %v763, %v816
  %818 = vset.pattern.permute.xlu0 31
  %819 = vperm.xlu0 %818, %v400
  %v820 = vpop.permute.xlu0 %819
  %v822 = vsub.f32 %v820, %v394
  %v823 = vmul.f32 %v822, %v822
  %824 = vset.pattern.permute.xlu0 47
  %825 = vperm.xlu0 %824, %v400
  %v826 = vpop.permute.xlu0 %825
  %v828 = vmul.f32 %v394, %v826
  %v829 = vadd.f32 %v823, %v828
  %v830 = vadd.f32 %v829, 1e-05
  %v831 = vrcp.pop %v830
  %832 = vset.pattern.permute.xlu0 39
  %833 = vperm.xlu0 %832, %v400
  %v834 = vpop.permute.xlu0 %833
  %v836 = vmul.f32 %v834, %v831
  %v837 = vmul.f32 %v836, %v822
  %v838 = vadd.f32 %v784, %v837
  %839 = vset.pattern.permute.xlu0 47
  %840 = vperm.xlu0 %839, %v397
  %v841 = vpop.permute.xlu0 %840
  %v843 = vmul.f32 %v836, %v841
  %v844 = vadd.f32 %v790, %v843
  %v845 = vmul.f32 %v393, %v817
  %v846 = vmul.f32 %v393, %v844
  %v847 = vmul.f32 %v399, 0.010367256
  %849 = vset.pattern.permute.xlu0 0
  %850 = vperm.xlu0 %849, %v847
  %v851 = vpop.permute.xlu0 %850
  %v853 = vmul.f32 %v851, %v393
  %v854 = vmul.f32 %v811, %v838
  %v855 = vmul.f32 %v845, %v846
  %v856 = vsub.f32 %v854, %v855
  %v857 = vmul.f32 %v811, %v846
  %v858 = vmul.f32 %v845, %v838
  %v859 = vadd.f32 %v857, %v858
  %v860 = vmul.f32 %v856, %v856
  %v861 = vmul.f32 %v859, %v859
  %v862 = vadd.f32 %v860, %v861
  %v863 = vrsqrt.pop %v862
  %v864 = vmul.f32 %v862, %v863
  %vm865 = vcmp.eq.f32.partialorder %v862, inf
  %v866 = vsel %vm865, %v862, %v864
  %vm867 = vcmp.eq.f32.partialorder %v862, 0.0
  %v868 = vand.u32 %v862, 2147483648
  %v869 = vsel %vm867, %v868, %v866
  %v870 = vadd.f32 %v869, %v856
  %v871 = vmul.f32 %v870, 0.5
  %v872 = vmax.f32 %v871, 0.0
  %v873 = vrsqrt.pop %v872
  %v874 = vmul.f32 %v872, %v873
  %vm875 = vcmp.eq.f32.partialorder %v872, inf
  %v876 = vsel %vm875, %v872, %v874
  %vm877 = vcmp.eq.f32.partialorder %v872, 0.0
  %v878 = vand.u32 %v872, 2147483648
  %v879 = vsel %vm877, %v878, %v876
  %v880 = vsub.f32 %v869, %v856
  %v881 = vmul.f32 %v880, 0.5
  %v882 = vmax.f32 %v881, 0.0
  %v883 = vrsqrt.pop %v882
  %v884 = vmul.f32 %v882, %v883
  %vm885 = vcmp.eq.f32.partialorder %v882, inf
  %v886 = vsel %vm885, %v882, %v884
  %vm887 = vcmp.eq.f32.partialorder %v882, 0.0
  %v888 = vand.u32 %v882, 2147483648
  %v889 = vsel %vm887, %v888, %v886
  %vm890 = vcmp.lt.f32.partialorder %v859, 0.0
  %v891 = vsub.f32 0.0, %v889
  %v892 = vsel %vm890, %v891, %v889
  %v893 = vmul.f32 %v853, %v879
  %v894 = vmul.f32 %v853, %v892
  %v895 = vmul.f32 %v893, 2.0
  %v896 = vmul.f32 %v893, %v893
  %v897 = vsub.f32 1.0, %v896
  %v898 = vmul.f32 %v894, %v894
  %v899 = vsub.f32 %v897, %v898
  %vm900 = vcmp.eq.f32.partialorder %v899, 0.0
  %v901 = vsel %vm900, 1.0, %v899
  %v902 = vrcp.pop %v901
  %v903 = vmul.f32 %v901, %v902
  %v904 = vsub.f32 2.0, %v903
  %v905 = vmul.f32 %v902, %v904
  %v906 = vmul.f32 %v895, %v905
  %v907 = vand.u32 2147483647, %v906
  %vm908 = vcmp.gt.f32.partialorder %v907, 2.4142137
  %vm909 = vcmp.gt.f32.partialorder %v907, 0.41421357
  %vm910 = vmxor %vm908, 1
  %vm911 = vmand %vm909, %vm910
  %v912 = vsel %vm911, 0.7853982, 0.0
  %v913 = vsel %vm908, 1.5707964, %v912
  %v914 = vsub.f32 %v907, 1.0
  %v915 = vsel %vm911, %v914, %v907
  %v916 = vsel %vm908, -1.0, %v915
  %v917 = vadd.f32 %v907, 1.0
  %v918 = vsel %vm911, %v917, 1.0
  %v919 = vsel %vm908, %v907, %v918
  %v920 = vrcp.pop %v919
  %v921 = vmul.f32 %v919, %v920
  %v922 = vsub.f32 2.0, %v921
  %v923 = vmul.f32 %v920, %v922
  %v924 = vmul.f32 %v916, %v923
  %v925 = vmul.f32 %v924, %v924
  %v926 = vmul.f32 %v925, 0.080537446
  %v927 = vsub.f32 %v926, 0.13877685
  %v928 = vmul.f32 %v927, %v925
  %v929 = vadd.f32 %v928, 0.19977711
  %v930 = vmul.f32 %v929, %v925
  %v931 = vsub.f32 %v930, 0.3333295
  %v932 = vmul.f32 %v931, %v925
  %v933 = vmul.f32 %v932, %v924
  %v934 = vadd.f32 %v933, %v924
  %v935 = vadd.f32 %v913, %v934
  %vm936 = vcmp.ge.f32.partialorder %v906, 0.0
  %v937 = vsub.f32 0.0, %v935
  %v938 = vsel %vm936, %v935, %v937
  %vm939 = vcmp.gt.f32.partialorder %v899, 0.0
  %vm940 = vcmp.lt.f32.partialorder %v899, 0.0
  %vm941 = vcmp.ge.f32.partialorder %v895, 0.0
  %v942 = vadd.f32 %v938, 3.1415927
  %v943 = vsub.f32 %v938, 3.1415927
  %v944 = vsel %vm941, %v942, %v943
  %vm945 = vcmp.gt.f32.partialorder %v895, 0.0
  %vm946 = vcmp.lt.f32.partialorder %v895, 0.0
  %v947 = vsel %vm946, -1.5707964, 0.0
  %v948 = vsel %vm945, 1.5707964, %v947
  %v949 = vsel %vm940, %v944, %v948
  %v950 = vsel %vm939, %v938, %v949
  %v951 = vmul.f32 %v950, 0.5
  %v952 = vadd.f32 %v894, 1.0
  %v953 = vmul.f32 %v952, %v952
  %v954 = vadd.f32 %v896, %v953
  %v955 = vsub.f32 %v894, 1.0
  %v956 = vmul.f32 %v955, %v955
  %v957 = vadd.f32 %v896, %v956
  %v958 = vrcp.pop %v957
  %v959 = vmul.f32 %v957, %v958
  %v960 = vsub.f32 2.0, %v959
  %v961 = vmul.f32 %v958, %v960
  %v962 = vmul.f32 %v954, %v961
  %v963 = vlog2.pop %v962
  %v964 = vmul.f32 %v963, 0.6931472
  %v965 = vmul.f32 %v964, 0.25
  %v966 = vmul.f32 %v951, 2.0
  %v967 = vmul.f32 %v965, 2.0
  %v968 = vmul.f32 %v967, 1.442695
  %v969 = vpow.pop %v968
  %v970 = vmul.f32 %v965, -2.0
  %v971 = vmul.f32 %v970, 1.442695
  %v972 = vpow.pop %v971
  %v973 = vand.u32 2147483647, %v966
  %vm974 = vcmp.le.f32.partialorder %v973, 0.7853982
  %vm975 = vcmp.lt.s32.totalorder %v966, 0
  %v976 = vand.u32 %v966, 2139095040
  %v977 = vshrl.u32 %v976, 23
  %v978 = vsub.s32 %v977, 127
  %v979 = vand.u32 2147483647, %v966
  %v980 = vand.u32 %v979, 8388607
  %v981 = vor.u32 %v980, 8388608
  %v982 = vsub.s32 0, %v981
  %v983 = vadd.s32 %v978, 1
  %vm984 = vcmp.gt.s32.totalorder %v983, 0
  %v985 = vsel %vm984, %v983, 0
  %v986 = vshrl.u32 %v985, 5
  %v987 = vand.u32 %v985, 31
  %v988 = vsub.s32 32, %v987
  %v989 = vshrl.u32 683565275, %v988
  %v990 = vshll.u32 683565275, %v987
  %v991 = vshrl.u32 2475754826, %v988
  %v992 = vor.u32 %v990, %v991
  %v993 = vshll.u32 2475754826, %v987
  %v994 = vshrl.u32 2131351028, %v988
  %v995 = vor.u32 %v993, %v994
  %v996 = vshll.u32 2131351028, %v987
  %v997 = vshrl.u32 2102212464, %v988
  %v998 = vor.u32 %v996, %v997
  %v999 = vshll.u32 2102212464, %v987
  %v1000 = vshrl.u32 920167782, %v988
  %v1001 = vor.u32 %v999, %v1000
  %v1002 = vshll.u32 920167782, %v987
  %v1003 = vshrl.u32 1326507024, %v988
  %v1004 = vor.u32 %v1002, %v1003
  %vm1005 = vcmp.lt.s32.totalorder %v986, 1
  %vm1006 = vcmp.lt.s32.totalorder %v986, 2
  %vm1007 = vcmp.lt.s32.totalorder %v986, 3
  %vm1008 = vcmp.lt.s32.totalorder %v986, 4
  %v1009 = vsel %vm1005, %v989, %v992
  %v1010 = vsel %vm1008, %v998, 2102212464
  %v1011 = vsel %vm1007, %v995, %v1010
  %v1012 = vsel %vm1006, %v1009, %v1011
  %v1013 = vsel %vm1005, %v992, %v995
  %v1014 = vsel %vm1008, %v1001, 920167782
  %v1015 = vsel %vm1007, %v998, %v1014
  %v1016 = vsel %vm1006, %v1013, %v1015
  %v1017 = vsel %vm1005, %v995, %v998
  %v1018 = vsel %vm1008, %v1004, 1326507024
  %v1019 = vsel %vm1007, %v1001, %v1018
  %v1020 = vsel %vm1006, %v1017, %v1019
  %v1021 = vshll.u32 %v981, 8
  %v1022 = vmul.u32.u64.compose %v1021, %v1020
  %v1023 = vextract.low.u32 %v1022
  %v1024 = vextract.high.u32 %v1022
  %v1025 = vmul.u32.u64.compose %v1021, %v1016
  %v1026 = vextract.low.u32 %v1025
  %v1027 = vextract.high.u32 %v1025
  %v1028 = vmul.u32 %v1021, %v1012
  %v1029 = vadd.s32 %v1024, %v1026
  %vm1030 = vc.u32 %v1024, %v1026
  %v1031 = vadd.s32 %v1027, 1
  %v1032 = vsel %vm1030, %v1031, %v1027
  %v1033 = vadd.s32 %v1028, %v1032
  %v1034 = vadd.s32 %v1033, 536870912
  %v1035 = vshrl.u32 %v1034, 30
  %v1036 = vshll.u32 %v1035, 30
  %v1037 = vsub.s32 %v1033, %v1036
  %vm1038 = vcmp.lt.s32.totalorder %v1037, 0
  %v1039 = vsub.s32 0, %v1037
  %v1040 = vsel %vm1038, %v1039, %v1037
  %v1041 = vclz %v1040
  %v1042 = vsub.s32 %v1041, 2
  %vm1043 = vcmp.gt.s32.totalorder 0, %v1042
  %v1044 = vsel %vm1043, 0, %v1042
  %v1045 = vsub.s32 32, %v1044
  %v1046 = vshll.u32 %v1037, %v1044
  %v1047 = vshrl.u32 %v1029, %v1045
  %v1048 = vor.u32 %v1046, %v1047
  %v1049 = vsub.s32 4294967266, %v1044
  %v1050 = vadd.s32 %v1049, 127
  %v1051 = vshll.u32 %v1050, 23
  %v1052 = vor.u32 4788187, %v1051
  %v1053 = vand.u32 2147483647, %v1052
  %v1055 = vcvt.s32.f32 %v1048
  %v1056 = vmul.f32 %v1055, %v1053
  %v1057 = vxor.u32 %v1056, 2147483648
  %v1058 = vsel %vm975, %v1057, %v1056
  %v1059 = vsub.s32 4, %v1035
  %v1060 = vsel %vm975, %v1059, %v1035
  %v1061 = vsel %vm974, %v966, %v1058
  %v1062 = vsel %vm974, 0, %v1060
  %v1063 = vcosq.f32.pop %v1061
  %v1064 = vsinq.f32.pop %v1061
  %vm1065 = vweird.f32 %v966
  %v1066 = vand.u32 %v1062, 3
  %vm1067 = vcmp.lt.s32.totalorder %v1066, 2
  %vm1068 = vcmp.eq.s32.totalorder %v1066, 0
  %v1069 = vxor.u32 %v1064, 2147483648
  %v1070 = vsel %vm1068, %v1063, %v1069
  %vm1071 = vcmp.eq.s32.totalorder %v1066, 2
  %v1072 = vxor.u32 %v1063, 2147483648
  %v1073 = vsel %vm1071, %v1072, %v1064
  %v1074 = vsel %vm1067, %v1070, %v1073
  %v1075 = vsel %vm1065, nan, %v1074
  %v1076 = vadd.f32 %v969, %v972
  %v1077 = vmul.f32 %v1076, 0.5
  %v1078 = vadd.f32 %v1075, %v1077
  %v1079 = vrcp.pop %v1078
  %v1080 = vmul.f32 %v1078, %v1079
  %v1081 = vsub.f32 2.0, %v1080
  %v1082 = vmul.f32 %v1079, %v1081
  %v1083 = vand.u32 2147483647, %v966
  %vm1084 = vcmp.le.f32.partialorder %v1083, 0.7853982
  %vm1085 = vcmp.lt.s32.totalorder %v966, 0
  %v1086 = vand.u32 %v966, 2139095040
  %v1087 = vshrl.u32 %v1086, 23
  %v1088 = vsub.s32 %v1087, 127
  %v1089 = vand.u32 2147483647, %v966
  %v1090 = vand.u32 %v1089, 8388607
  %v1091 = vor.u32 %v1090, 8388608
  %v1092 = vsub.s32 0, %v1091
  %v1093 = vadd.s32 %v1088, 1
  %vm1094 = vcmp.gt.s32.totalorder %v1093, 0
  %v1095 = vsel %vm1094, %v1093, 0
  %v1096 = vshrl.u32 %v1095, 5
  %v1097 = vand.u32 %v1095, 31
  %v1098 = vsub.s32 32, %v1097
  %v1099 = vshrl.u32 683565275, %v1098
  %v1100 = vshll.u32 683565275, %v1097
  %v1101 = vshrl.u32 2475754826, %v1098
  %v1102 = vor.u32 %v1100, %v1101
  %v1103 = vshll.u32 2475754826, %v1097
  %v1104 = vshrl.u32 2131351028, %v1098
  %v1105 = vor.u32 %v1103, %v1104
  %v1106 = vshll.u32 2131351028, %v1097
  %v1107 = vshrl.u32 2102212464, %v1098
  %v1108 = vor.u32 %v1106, %v1107
  %v1109 = vshll.u32 2102212464, %v1097
  %v1110 = vshrl.u32 920167782, %v1098
  %v1111 = vor.u32 %v1109, %v1110
  %v1112 = vshll.u32 920167782, %v1097
  %v1113 = vshrl.u32 1326507024, %v1098
  %v1114 = vor.u32 %v1112, %v1113
  %vm1115 = vcmp.lt.s32.totalorder %v1096, 1
  %vm1116 = vcmp.lt.s32.totalorder %v1096, 2
  %vm1117 = vcmp.lt.s32.totalorder %v1096, 3
  %vm1118 = vcmp.lt.s32.totalorder %v1096, 4
  %v1119 = vsel %vm1115, %v1099, %v1102
  %v1120 = vsel %vm1118, %v1108, 2102212464
  %v1121 = vsel %vm1117, %v1105, %v1120
  %v1122 = vsel %vm1116, %v1119, %v1121
  %v1123 = vsel %vm1115, %v1102, %v1105
  %v1124 = vsel %vm1118, %v1111, 920167782
  %v1125 = vsel %vm1117, %v1108, %v1124
  %v1126 = vsel %vm1116, %v1123, %v1125
  %v1127 = vsel %vm1115, %v1105, %v1108
  %v1128 = vsel %vm1118, %v1114, 1326507024
  %v1129 = vsel %vm1117, %v1111, %v1128
  %v1130 = vsel %vm1116, %v1127, %v1129
  %v1131 = vshll.u32 %v1091, 8
  %v1132 = vmul.u32.u64.compose %v1131, %v1130
  %v1133 = vextract.low.u32 %v1132
  %v1134 = vextract.high.u32 %v1132
  %v1135 = vmul.u32.u64.compose %v1131, %v1126
  %v1136 = vextract.low.u32 %v1135
  %v1137 = vextract.high.u32 %v1135
  %v1138 = vmul.u32 %v1131, %v1122
  %v1139 = vadd.s32 %v1134, %v1136
  %vm1140 = vc.u32 %v1134, %v1136
  %v1141 = vadd.s32 %v1137, 1
  %v1142 = vsel %vm1140, %v1141, %v1137
  %v1143 = vadd.s32 %v1138, %v1142
  %v1144 = vadd.s32 %v1143, 536870912
  %v1145 = vshrl.u32 %v1144, 30
  %v1146 = vshll.u32 %v1145, 30
  %v1147 = vsub.s32 %v1143, %v1146
  %vm1148 = vcmp.lt.s32.totalorder %v1147, 0
  %v1149 = vsub.s32 0, %v1147
  %v1150 = vsel %vm1148, %v1149, %v1147
  %v1151 = vclz %v1150
  %v1152 = vsub.s32 %v1151, 2
  %vm1153 = vcmp.gt.s32.totalorder 0, %v1152
  %v1154 = vsel %vm1153, 0, %v1152
  %v1155 = vsub.s32 32, %v1154
  %v1156 = vshll.u32 %v1147, %v1154
  %v1157 = vshrl.u32 %v1139, %v1155
  %v1158 = vor.u32 %v1156, %v1157
  %v1159 = vsub.s32 4294967266, %v1154
  %v1160 = vadd.s32 %v1159, 127
  %v1161 = vshll.u32 %v1160, 23
  %v1162 = vor.u32 4788187, %v1161
  %v1163 = vand.u32 2147483647, %v1162
  %v1165 = vcvt.s32.f32 %v1158
  %v1166 = vmul.f32 %v1165, %v1163
  %v1167 = vxor.u32 %v1166, 2147483648
  %v1168 = vsel %vm1085, %v1167, %v1166
  %v1169 = vsub.s32 4, %v1145
  %v1170 = vsel %vm1085, %v1169, %v1145
  %v1171 = vsel %vm1084, %v966, %v1168
  %v1172 = vsel %vm1084, 0, %v1170
  %v1173 = vcosq.f32.pop %v1171
  %v1174 = vsinq.f32.pop %v1171
  %vm1175 = vweird.f32 %v966
  %v1176 = vadd.s32 %v1172, 3
  %v1177 = vand.u32 %v1176, 3
  %vm1178 = vcmp.lt.s32.totalorder %v1177, 2
  %vm1179 = vcmp.eq.s32.totalorder %v1177, 0
  %v1180 = vxor.u32 %v1174, 2147483648
  %v1181 = vsel %vm1179, %v1173, %v1180
  %vm1182 = vcmp.eq.s32.totalorder %v1177, 2
  %v1183 = vxor.u32 %v1173, 2147483648
  %v1184 = vsel %vm1182, %v1183, %v1174
  %v1185 = vsel %vm1178, %v1181, %v1184
  %v1186 = vsel %vm1175, nan, %v1185
  %v1187 = vmul.f32 %v1186, %v1082
  %v1188 = vsub.f32 %v969, %v972
  %v1189 = vmul.f32 %v1188, 0.5
  %v1190 = vmul.f32 %v1189, %v1082
  %v1191 = vmul.f32 %v1187, %v1187
  %v1192 = vmul.f32 %v1190, %v1190
  %v1193 = vadd.f32 %v1191, %v1192
  %v1194 = vrcp.pop %v1193
  %v1195 = vmul.f32 %v1193, %v1194
  %v1196 = vsub.f32 2.0, %v1195
  %v1197 = vmul.f32 %v1194, %v1196
  %v1198 = vmul.f32 %v951, %v1187
  %v1199 = vmul.f32 %v965, %v1190
  %v1200 = vadd.f32 %v1198, %v1199
  %v1201 = vmul.f32 %v1200, %v1197
  %v1202 = vmul.f32 %v965, %v1187
  %v1203 = vmul.f32 %v951, %v1190
  %v1204 = vsub.f32 %v1202, %v1203
  %v1205 = vmul.f32 %v1204, %v1197
  %v1206 = vmul.f32 %v1201, %v811
  %v1207 = vmul.f32 %v1205, %v845
  %v1208 = vsub.f32 %v1206, %v1207
  %v1209 = vmul.f32 %v1201, %v845
  %v1210 = vmul.f32 %v1205, %v811
  %v1211 = vadd.f32 %v1209, %v1210
  %v1212 = vmul.f32 %v1201, %v838
  %v1213 = vmul.f32 %v1205, %v846
  %v1214 = vsub.f32 %v1212, %v1213
  %v1215 = vmul.f32 %v1201, %v846
  %v1216 = vmul.f32 %v1205, %v838
  %v1217 = vadd.f32 %v1215, %v1216
  %v1218 = vmul.f32 %v1208, %v1214
  %v1219 = vmul.f32 %v1211, %v1217
  %v1220 = vsub.f32 %v1218, %v1219
  %v1221 = vmul.f32 %v1208, %v1217
  %v1222 = vmul.f32 %v1211, %v1214
  %v1223 = vadd.f32 %v1221, %v1222
  %v1224 = vmul.f32 %v1220, %v1220
  %v1225 = vmul.f32 %v1223, %v1223
  %v1226 = vadd.f32 %v1224, %v1225
  %v1227 = vrsqrt.pop %v1226
  %v1228 = vmul.f32 %v1226, %v1227
  %vm1229 = vcmp.eq.f32.partialorder %v1226, inf
  %v1230 = vsel %vm1229, %v1226, %v1228
  %vm1231 = vcmp.eq.f32.partialorder %v1226, 0.0
  %v1232 = vand.u32 %v1226, 2147483648
  %v1233 = vsel %vm1231, %v1232, %v1230
  %v1234 = vadd.f32 %v1233, %v1220
  %v1235 = vmul.f32 %v1234, 0.5
  %v1236 = vmax.f32 %v1235, 0.0
  %v1237 = vrsqrt.pop %v1236
  %v1238 = vmul.f32 %v1236, %v1237
  %vm1239 = vcmp.eq.f32.partialorder %v1236, inf
  %v1240 = vsel %vm1239, %v1236, %v1238
  %vm1241 = vcmp.eq.f32.partialorder %v1236, 0.0
  %v1242 = vand.u32 %v1236, 2147483648
  %v1243 = vsel %vm1241, %v1242, %v1240
  %v1244 = vsub.f32 %v1233, %v1220
  %v1245 = vmul.f32 %v1244, 0.5
  %v1246 = vmax.f32 %v1245, 0.0
  %v1247 = vrsqrt.pop %v1246
  %v1248 = vmul.f32 %v1246, %v1247
  %vm1249 = vcmp.eq.f32.partialorder %v1246, inf
  %v1250 = vsel %vm1249, %v1246, %v1248
  %vm1251 = vcmp.eq.f32.partialorder %v1246, 0.0
  %v1252 = vand.u32 %v1246, 2147483648
  %v1253 = vsel %vm1251, %v1252, %v1250
  %vm1254 = vcmp.lt.f32.partialorder %v1223, 0.0
  %v1255 = vsub.f32 0.0, %v1253
  %v1256 = vsel %vm1254, %v1255, %v1253
  %v1257 = vand.u32 2147483647, %v1256
  %v1258 = vmul.f32 %v1208, %v1208
  %v1259 = vmul.f32 %v1211, %v1211
  %v1260 = vadd.f32 %v1258, %v1259
  %v1261 = vrcp.pop %v1260
  %v1262 = vmul.f32 %v1260, %v1261
  %v1263 = vsub.f32 2.0, %v1262
  %v1264 = vmul.f32 %v1261, %v1263
  %v1265 = vadd.f32 %v1218, %v1219
  %v1266 = vmul.f32 %v1265, %v1264
  %v1267 = vsub.f32 %v1221, %v1222
  %v1268 = vmul.f32 %v1267, %v1264
  %v1269 = vmul.f32 %v1266, %v1266
  %v1270 = vmul.f32 %v1268, %v1268
  %v1271 = vadd.f32 %v1269, %v1270
  %v1272 = vrsqrt.pop %v1271
  %v1273 = vmul.f32 %v1271, %v1272
  %vm1274 = vcmp.eq.f32.partialorder %v1271, inf
  %v1275 = vsel %vm1274, %v1271, %v1273
  %vm1276 = vcmp.eq.f32.partialorder %v1271, 0.0
  %v1277 = vand.u32 %v1271, 2147483648
  %v1278 = vsel %vm1276, %v1277, %v1275
  %v1279 = vadd.f32 %v1278, %v1266
  %v1280 = vmul.f32 %v1279, 0.5
  %v1281 = vmax.f32 %v1280, 0.0
  %v1282 = vrsqrt.pop %v1281
  %v1283 = vmul.f32 %v1281, %v1282
  %vm1284 = vcmp.eq.f32.partialorder %v1281, inf
  %v1285 = vsel %vm1284, %v1281, %v1283
  %vm1286 = vcmp.eq.f32.partialorder %v1281, 0.0
  %v1287 = vand.u32 %v1281, 2147483648
  %v1288 = vsel %vm1286, %v1287, %v1285
  %v1289 = vsub.f32 %v1278, %v1266
  %v1290 = vmul.f32 %v1289, 0.5
  %v1291 = vmax.f32 %v1290, 0.0
  %v1292 = vrsqrt.pop %v1291
  %v1293 = vmul.f32 %v1291, %v1292
  %vm1294 = vcmp.eq.f32.partialorder %v1291, inf
  %v1295 = vsel %vm1294, %v1291, %v1293
  %vm1296 = vcmp.eq.f32.partialorder %v1291, 0.0
  %v1297 = vand.u32 %v1291, 2147483648
  %v1298 = vsel %vm1296, %v1297, %v1295
  %vm1299 = vcmp.lt.f32.partialorder %v1268, 0.0
  %v1300 = vsub.f32 0.0, %v1298
  %v1301 = vsel %vm1299, %v1300, %v1298
  %v1302 = vand.u32 2147483647, %v1288
  %v1303 = vmul.f32 %v399, 0.02094395
  %1305 = vset.pattern.permute.xlu0 0
  %1306 = vperm.xlu0 %1305, %v1303
  %v1307 = vpop.permute.xlu0 %1306
  %v1309 = vmul.f32 %v1307, %v393
  %v1310 = vmul.f32 %v1309, %v1243
  %v1311 = vmul.f32 %v1309, %v1257
  %v1312 = vand.u32 2147483647, %v1310
  %vm1313 = vcmp.le.f32.partialorder %v1312, 0.7853982
  %vm1314 = vcmp.lt.s32.totalorder %v1310, 0
  %v1315 = vand.u32 %v1310, 2139095040
  %v1316 = vshrl.u32 %v1315, 23
  %v1317 = vsub.s32 %v1316, 127
  %v1318 = vand.u32 2147483647, %v1310
  %v1319 = vand.u32 %v1318, 8388607
  %v1320 = vor.u32 %v1319, 8388608
  %v1321 = vsub.s32 0, %v1320
  %v1322 = vadd.s32 %v1317, 1
  %vm1323 = vcmp.gt.s32.totalorder %v1322, 0
  %v1324 = vsel %vm1323, %v1322, 0
  %v1325 = vshrl.u32 %v1324, 5
  %v1326 = vand.u32 %v1324, 31
  %v1327 = vsub.s32 32, %v1326
  %v1328 = vshrl.u32 683565275, %v1327
  %v1329 = vshll.u32 683565275, %v1326
  %v1330 = vshrl.u32 2475754826, %v1327
  %v1331 = vor.u32 %v1329, %v1330
  %v1332 = vshll.u32 2475754826, %v1326
  %v1333 = vshrl.u32 2131351028, %v1327
  %v1334 = vor.u32 %v1332, %v1333
  %v1335 = vshll.u32 2131351028, %v1326
  %v1336 = vshrl.u32 2102212464, %v1327
  %v1337 = vor.u32 %v1335, %v1336
  %v1338 = vshll.u32 2102212464, %v1326
  %v1339 = vshrl.u32 920167782, %v1327
  %v1340 = vor.u32 %v1338, %v1339
  %v1341 = vshll.u32 920167782, %v1326
  %v1342 = vshrl.u32 1326507024, %v1327
  %v1343 = vor.u32 %v1341, %v1342
  %vm1344 = vcmp.lt.s32.totalorder %v1325, 1
  %vm1345 = vcmp.lt.s32.totalorder %v1325, 2
  %vm1346 = vcmp.lt.s32.totalorder %v1325, 3
  %vm1347 = vcmp.lt.s32.totalorder %v1325, 4
  %v1348 = vsel %vm1344, %v1328, %v1331
  %v1349 = vsel %vm1347, %v1337, 2102212464
  %v1350 = vsel %vm1346, %v1334, %v1349
  %v1351 = vsel %vm1345, %v1348, %v1350
  %v1352 = vsel %vm1344, %v1331, %v1334
  %v1353 = vsel %vm1347, %v1340, 920167782
  %v1354 = vsel %vm1346, %v1337, %v1353
  %v1355 = vsel %vm1345, %v1352, %v1354
  %v1356 = vsel %vm1344, %v1334, %v1337
  %v1357 = vsel %vm1347, %v1343, 1326507024
  %v1358 = vsel %vm1346, %v1340, %v1357
  %v1359 = vsel %vm1345, %v1356, %v1358
  %v1360 = vshll.u32 %v1320, 8
  %v1361 = vmul.u32.u64.compose %v1360, %v1359
  %v1362 = vextract.low.u32 %v1361
  %v1363 = vextract.high.u32 %v1361
  %v1364 = vmul.u32.u64.compose %v1360, %v1355
  %v1365 = vextract.low.u32 %v1364
  %v1366 = vextract.high.u32 %v1364
  %v1367 = vmul.u32 %v1360, %v1351
  %v1368 = vadd.s32 %v1363, %v1365
  %vm1369 = vc.u32 %v1363, %v1365
  %v1370 = vadd.s32 %v1366, 1
  %v1371 = vsel %vm1369, %v1370, %v1366
  %v1372 = vadd.s32 %v1367, %v1371
  %v1373 = vadd.s32 %v1372, 536870912
  %v1374 = vshrl.u32 %v1373, 30
  %v1375 = vshll.u32 %v1374, 30
  %v1376 = vsub.s32 %v1372, %v1375
  %vm1377 = vcmp.lt.s32.totalorder %v1376, 0
  %v1378 = vsub.s32 0, %v1376
  %v1379 = vsel %vm1377, %v1378, %v1376
  %v1380 = vclz %v1379
  %v1381 = vsub.s32 %v1380, 2
  %vm1382 = vcmp.gt.s32.totalorder 0, %v1381
  %v1383 = vsel %vm1382, 0, %v1381
  %v1384 = vsub.s32 32, %v1383
  %v1385 = vshll.u32 %v1376, %v1383
  %v1386 = vshrl.u32 %v1368, %v1384
  %v1387 = vor.u32 %v1385, %v1386
  %v1388 = vsub.s32 4294967266, %v1383
  %v1389 = vadd.s32 %v1388, 127
  %v1390 = vshll.u32 %v1389, 23
  %v1391 = vor.u32 4788187, %v1390
  %v1392 = vand.u32 2147483647, %v1391
  %v1394 = vcvt.s32.f32 %v1387
  %v1395 = vmul.f32 %v1394, %v1392
  %v1396 = vxor.u32 %v1395, 2147483648
  %v1397 = vsel %vm1314, %v1396, %v1395
  %v1398 = vsub.s32 4, %v1374
  %v1399 = vsel %vm1314, %v1398, %v1374
  %v1400 = vsel %vm1313, %v1310, %v1397
  %v1401 = vsel %vm1313, 0, %v1399
  %v1402 = vcosq.f32.pop %v1400
  %v1403 = vsinq.f32.pop %v1400
  %vm1404 = vweird.f32 %v1310
  %v1405 = vadd.s32 %v1401, 3
  %v1406 = vand.u32 %v1405, 3
  %vm1407 = vcmp.lt.s32.totalorder %v1406, 2
  %vm1408 = vcmp.eq.s32.totalorder %v1406, 0
  %v1409 = vxor.u32 %v1403, 2147483648
  %v1410 = vsel %vm1408, %v1402, %v1409
  %vm1411 = vcmp.eq.s32.totalorder %v1406, 2
  %v1412 = vxor.u32 %v1402, 2147483648
  %v1413 = vsel %vm1411, %v1412, %v1403
  %v1414 = vsel %vm1407, %v1410, %v1413
  %v1415 = vsel %vm1404, nan, %v1414
  %v1416 = vand.u32 2147483647, %v1310
  %vm1417 = vcmp.le.f32.partialorder %v1416, 0.7853982
  %vm1418 = vcmp.lt.s32.totalorder %v1310, 0
  %v1419 = vand.u32 %v1310, 2139095040
  %v1420 = vshrl.u32 %v1419, 23
  %v1421 = vsub.s32 %v1420, 127
  %v1422 = vand.u32 2147483647, %v1310
  %v1423 = vand.u32 %v1422, 8388607
  %v1424 = vor.u32 %v1423, 8388608
  %v1425 = vsub.s32 0, %v1424
  %v1426 = vadd.s32 %v1421, 1
  %vm1427 = vcmp.gt.s32.totalorder %v1426, 0
  %v1428 = vsel %vm1427, %v1426, 0
  %v1429 = vshrl.u32 %v1428, 5
  %v1430 = vand.u32 %v1428, 31
  %v1431 = vsub.s32 32, %v1430
  %v1432 = vshrl.u32 683565275, %v1431
  %v1433 = vshll.u32 683565275, %v1430
  %v1434 = vshrl.u32 2475754826, %v1431
  %v1435 = vor.u32 %v1433, %v1434
  %v1436 = vshll.u32 2475754826, %v1430
  %v1437 = vshrl.u32 2131351028, %v1431
  %v1438 = vor.u32 %v1436, %v1437
  %v1439 = vshll.u32 2131351028, %v1430
  %v1440 = vshrl.u32 2102212464, %v1431
  %v1441 = vor.u32 %v1439, %v1440
  %v1442 = vshll.u32 2102212464, %v1430
  %v1443 = vshrl.u32 920167782, %v1431
  %v1444 = vor.u32 %v1442, %v1443
  %v1445 = vshll.u32 920167782, %v1430
  %v1446 = vshrl.u32 1326507024, %v1431
  %v1447 = vor.u32 %v1445, %v1446
  %vm1448 = vcmp.lt.s32.totalorder %v1429, 1
  %vm1449 = vcmp.lt.s32.totalorder %v1429, 2
  %vm1450 = vcmp.lt.s32.totalorder %v1429, 3
  %vm1451 = vcmp.lt.s32.totalorder %v1429, 4
  %v1452 = vsel %vm1448, %v1432, %v1435
  %v1453 = vsel %vm1451, %v1441, 2102212464
  %v1454 = vsel %vm1450, %v1438, %v1453
  %v1455 = vsel %vm1449, %v1452, %v1454
  %v1456 = vsel %vm1448, %v1435, %v1438
  %v1457 = vsel %vm1451, %v1444, 920167782
  %v1458 = vsel %vm1450, %v1441, %v1457
  %v1459 = vsel %vm1449, %v1456, %v1458
  %v1460 = vsel %vm1448, %v1438, %v1441
  %v1461 = vsel %vm1451, %v1447, 1326507024
  %v1462 = vsel %vm1450, %v1444, %v1461
  %v1463 = vsel %vm1449, %v1460, %v1462
  %v1464 = vshll.u32 %v1424, 8
  %v1465 = vmul.u32.u64.compose %v1464, %v1463
  %v1466 = vextract.low.u32 %v1465
  %v1467 = vextract.high.u32 %v1465
  %v1468 = vmul.u32.u64.compose %v1464, %v1459
  %v1469 = vextract.low.u32 %v1468
  %v1470 = vextract.high.u32 %v1468
  %v1471 = vmul.u32 %v1464, %v1455
  %v1472 = vadd.s32 %v1467, %v1469
  %vm1473 = vc.u32 %v1467, %v1469
  %v1474 = vadd.s32 %v1470, 1
  %v1475 = vsel %vm1473, %v1474, %v1470
  %v1476 = vadd.s32 %v1471, %v1475
  %v1477 = vadd.s32 %v1476, 536870912
  %v1478 = vshrl.u32 %v1477, 30
  %v1479 = vshll.u32 %v1478, 30
  %v1480 = vsub.s32 %v1476, %v1479
  %vm1481 = vcmp.lt.s32.totalorder %v1480, 0
  %v1482 = vsub.s32 0, %v1480
  %v1483 = vsel %vm1481, %v1482, %v1480
  %v1484 = vclz %v1483
  %v1485 = vsub.s32 %v1484, 2
  %vm1486 = vcmp.gt.s32.totalorder 0, %v1485
  %v1487 = vsel %vm1486, 0, %v1485
  %v1488 = vsub.s32 32, %v1487
  %v1489 = vshll.u32 %v1480, %v1487
  %v1490 = vshrl.u32 %v1472, %v1488
  %v1491 = vor.u32 %v1489, %v1490
  %v1492 = vsub.s32 4294967266, %v1487
  %v1493 = vadd.s32 %v1492, 127
  %v1494 = vshll.u32 %v1493, 23
  %v1495 = vor.u32 4788187, %v1494
  %v1496 = vand.u32 2147483647, %v1495
  %v1498 = vcvt.s32.f32 %v1491
  %v1499 = vmul.f32 %v1498, %v1496
  %v1500 = vxor.u32 %v1499, 2147483648
  %v1501 = vsel %vm1418, %v1500, %v1499
  %v1502 = vsub.s32 4, %v1478
  %v1503 = vsel %vm1418, %v1502, %v1478
  %v1504 = vsel %vm1417, %v1310, %v1501
  %v1505 = vsel %vm1417, 0, %v1503
  %v1506 = vcosq.f32.pop %v1504
  %v1507 = vsinq.f32.pop %v1504
  %vm1508 = vweird.f32 %v1310
  %v1509 = vand.u32 %v1505, 3
  %vm1510 = vcmp.lt.s32.totalorder %v1509, 2
  %vm1511 = vcmp.eq.s32.totalorder %v1509, 0
  %v1512 = vxor.u32 %v1507, 2147483648
  %v1513 = vsel %vm1511, %v1506, %v1512
  %vm1514 = vcmp.eq.s32.totalorder %v1509, 2
  %v1515 = vxor.u32 %v1506, 2147483648
  %v1516 = vsel %vm1514, %v1515, %v1507
  %v1517 = vsel %vm1510, %v1513, %v1516
  %v1518 = vsel %vm1508, nan, %v1517
  %v1519 = vmul.f32 %v1311, 1.442695
  %v1520 = vpow.pop %v1519
  %v1521 = vsub.f32 0.0, %v1311
  %v1522 = vmul.f32 %v1521, 1.442695
  %v1523 = vpow.pop %v1522
  %v1524 = vadd.f32 %v1520, %v1523
  %v1525 = vmul.f32 %v1524, 0.5
  %v1526 = vsub.f32 %v1520, %v1523
  %v1527 = vmul.f32 %v1526, 0.5
  %v1528 = vmul.f32 %v1415, %v1525
  %v1529 = vmul.f32 %v1518, %v1527
  %v1530 = vmul.f32 %v1518, %v1525
  %v1531 = vsub.f32 0.0, %v1415
  %v1532 = vmul.f32 %v1531, %v1527
  %v1533 = vadd.f32 %v1302, 1e-05
  %v1534 = vmul.f32 %v1533, %v1533
  %v1535 = vmul.f32 %v1301, %v1301
  %v1536 = vadd.f32 %v1534, %v1535
  %v1537 = vrcp.pop %v1536
  %v1538 = vmul.f32 %v1536, %v1537
  %v1539 = vsub.f32 2.0, %v1538
  %v1540 = vmul.f32 %v1537, %v1539
  %v1541 = vmul.f32 %v1533, %v1540
  %v1542 = vsub.f32 0.0, %v1301
  %v1543 = vmul.f32 %v1542, %v1540
  %v1544 = vsub.f32 %v1302, %v1541
  %v1545 = vsub.f32 %v1301, %v1543
  %v1546 = vmul.f32 %v1544, %v1528
  %v1547 = vmul.f32 %v1545, %v1529
  %v1548 = vsub.f32 %v1546, %v1547
  %v1549 = vmul.f32 %v1544, %v1529
  %v1550 = vmul.f32 %v1545, %v1528
  %v1551 = vadd.f32 %v1549, %v1550
  %v1552 = vmul.f32 %v1551, -0.5
  %v1553 = vmul.f32 %v1548, 0.5
  %v1554 = vadd.f32 %v1302, %v1541
  %v1555 = vadd.f32 %v1301, %v1543
  %v1556 = vmul.f32 %v1554, %v1528
  %v1557 = vmul.f32 %v1555, %v1529
  %v1558 = vsub.f32 %v1556, %v1557
  %v1559 = vmul.f32 %v1554, %v1529
  %v1560 = vmul.f32 %v1555, %v1528
  %v1561 = vadd.f32 %v1559, %v1560
  %v1562 = vmul.f32 %v1561, 0.5
  %v1563 = vadd.f32 %v1530, %v1562
  %v1564 = vadd.f32 %v1563, 1e-05
  %v1565 = vmul.f32 %v1558, 0.5
  %v1566 = vsub.f32 %v1532, %v1565
  %v1567 = vmul.f32 %v1564, %v1564
  %v1568 = vmul.f32 %v1566, %v1566
  %v1569 = vadd.f32 %v1567, %v1568
  %v1570 = vrcp.pop %v1569
  %v1571 = vmul.f32 %v1569, %v1570
  %v1572 = vsub.f32 2.0, %v1571
  %v1573 = vmul.f32 %v1570, %v1572
  %v1574 = vmul.f32 %v1552, %v1564
  %v1575 = vmul.f32 %v1553, %v1566
  %v1576 = vadd.f32 %v1574, %v1575
  %v1577 = vmul.f32 %v1576, %v1573
  %s1578 = smul.u32 0, 4
  %s1579 = smul.addr %s1578, 8
  %s1580 = scalar_lea.vmem %s11, %s1579
  %1581 = vst [vmem:[%s1580] sm:$0xff] %v1577
  %v1582 = vmul.f32 %v1553, %v1564
  %v1583 = vmul.f32 %v1552, %v1566
  %v1584 = vsub.f32 %v1582, %v1583
  %v1585 = vmul.f32 %v1584, %v1573
  %1586 = vst [vmem:[%s1580 + $0x8] sm:$0xff] %v1585
  %v1587 = vmul.f32 %v1564, %v1573
  %1588 = vst [vmem:[%s1580 + $0x10] sm:$0xff] %v1587
  %v1589 = vsub.f32 0.0, %v1566
  %v1590 = vmul.f32 %v1589, %v1573
  %1591 = vst [vmem:[%s1580 + $0x18] sm:$0xff] %v1590
  // Predicated region
  $region46: #{lorentz_dnn_forward.1} parent=0 // pred_check
    _
  $region47: #{lorentz_dnn_forward.1} parent=0 // pred_check_branch
    %1593 = sbr.rel (0) target = $region49
  $region48: #{lorentz_dnn_forward.1} parent=0 // pred_region
    _
  $region49: #{lorentz_dnn_forward.1} parent=0 // pred_fallthru
    _
  // Predicated region
  $region50: #{lorentz_dnn_forward.1} parent=0 // pred_check
    _
  $region51: #{lorentz_dnn_forward.1} parent=0 // pred_check_branch
    %1595 = sbr.rel (0) target = $region53
  $region52: #{lorentz_dnn_forward.1} parent=0 // pred_region
    _
  $region53: #{lorentz_dnn_forward.1} parent=0 // pred_fallthru
    _

</llo_original>
